<compile_context>
chip_gen: v6e
topology: v6e:2x2x1
jax: 0.10.0
libtpu: 0.0.40
codegen_flags: <defaults>
</compile_context>

<pallas_src>
import functools

import jax
import jax.numpy as jnp
from jax.experimental import pallas as pl
from jax.experimental.pallas import tpu as pltpu


def _layernorm(h, g, b, eps=1e-5):
    mu = jnp.mean(h, axis=-1, keepdims=True)
    var = jnp.mean((h - mu) ** 2, axis=-1, keepdims=True)
    return (h - mu) * jax.lax.rsqrt(var + eps) * g + b


def block_kernel(x_ref, ln1g_ref, ln1b_ref, wqkv_ref, wp_ref, bp_ref,
                 ln2g_ref, ln2b_ref, w1_ref, b1_ref, w2_ref, b2_ref,
                 o_ref, *, n_head):
    x = x_ref[0]                                   # (T, C) f32
    T, C = x.shape
    hs = C // n_head
    scale = hs ** (-0.5)

    # ---- x1 = x + MHA(LN1(x)) -------------------------------------------
    h = _layernorm(x, ln1g_ref[...], ln1b_ref[...])                 # f32
    qkv = jnp.dot(h.astype(jnp.bfloat16), wqkv_ref[...],
                  preferred_element_type=jnp.float32)               # (T, 3C)
    qkv = qkv.astype(jnp.bfloat16)

    # Head split: static lane slices stacked along a leading batch axis so the
    # score / PV matmuls run as two batched MXU einsums.
    def heads(off):
        return jnp.stack(
            [qkv[:, off + hh * hs: off + (hh + 1) * hs] for hh in range(n_head)],
            axis=0)                                                 # (H, T, hs)
    q = heads(0)
    k = heads(C)
    v = heads(2 * C)

    rows = jax.lax.broadcasted_iota(jnp.int32, (T, T), 0)
    cols = jax.lax.broadcasted_iota(jnp.int32, (T, T), 1)
    keep = (rows >= cols)[None, :, :]                               # (1, T, T)

    s = jnp.einsum("hqd,hkd->hqk", q, k,
                   preferred_element_type=jnp.float32) * scale      # (H, T, T)
    s = jnp.where(keep, s, -jnp.inf)
    s = s - jnp.max(s, axis=-1, keepdims=True)
    e = jnp.exp(s)
    denom = jnp.sum(e, axis=-1, keepdims=True)
    p = e * pl.reciprocal(denom, approx=True)                       # EUP recip
    # TODO(synk): dropout on attention probabilities skipped (eval mode / p=0)

    ctx = jnp.einsum("hqk,hkd->hqd", p.astype(jnp.bfloat16), v,
                     preferred_element_type=jnp.float32)            # (H, T, hs)
    ctx2d = jnp.concatenate([ctx[hh] for hh in range(n_head)], axis=-1)  # (T, C)

    attn = jnp.dot(ctx2d.astype(jnp.bfloat16), wp_ref[...],
                   preferred_element_type=jnp.float32) + bp_ref[...]
    # TODO(synk): dropout after the output projection skipped (eval mode / p=0)
    x1 = x + attn

    # ---- out = x1 + FFN(LN2(x1)) ------------------------------------------
    h2 = _layernorm(x1, ln2g_ref[...], ln2b_ref[...])
    ff = jnp.dot(h2.astype(jnp.bfloat16), w1_ref[...],
                 preferred_element_type=jnp.float32) + b1_ref[...]
    ff = jnp.maximum(ff, 0.0)
    ff = jnp.dot(ff.astype(jnp.bfloat16), w2_ref[...],
                 preferred_element_type=jnp.float32) + b2_ref[...]
    # TODO(synk): dropout after the FFN skipped (eval mode / p=0)

    o_ref[0] = x1 + ff


def transformer_block(x, params, n_head):
    (ln1g, ln1b, wq, wk, wv, wp, bp, ln2g, ln2b, w1, b1, w2, b2) = params
    B, T, C = x.shape

    # Fuse Q/K/V into one (C, 3C) weight and feed the MXU in bf16.
    wqkv = jnp.concatenate([wq, wk, wv], axis=1).astype(jnp.bfloat16)
    wp_bf = wp.astype(jnp.bfloat16)
    w1_bf = w1.astype(jnp.bfloat16)
    w2_bf = w2.astype(jnp.bfloat16)

    full = lambda shape: pl.BlockSpec(shape, lambda b: (0,) * len(shape))
    in_specs = [
        pl.BlockSpec((1, T, C), lambda b: (b, 0, 0)),   # x
        full((1, C)), full((1, C)),                     # ln1 gamma, beta
        full((C, 3 * C)),                               # Wqkv (fused, bf16)
        full((C, C)), full((1, C)),                     # Wproj (bf16), bproj
        full((1, C)), full((1, C)),                     # ln2 gamma, beta
        full((C, 4 * C)), full((1, 4 * C)),             # W1 (bf16), b1
        full((4 * C, C)), full((1, C)),                 # W2 (bf16), b2
    ]

    flops = 2 * B * T * C * (12 * C + 2 * T)
    transcendentals = B * n_head * T * T + 4 * B * T
    bytes_accessed = (2 * B * T * C * 4                       # x in + out (f32)
                      + (3 * C * C + C * C + 8 * C * C) * 2   # bf16 weights
                      + 10 * C * 4)                           # ln / bias params

    return pl.pallas_call(
        functools.partial(block_kernel, n_head=n_head),
        out_shape=jax.ShapeDtypeStruct((B, T, C), jnp.float32),
        grid_spec=pltpu.PrefetchScalarGridSpec(
            num_scalar_prefetch=0,
            grid=(B,),
            in_specs=in_specs,
            out_specs=pl.BlockSpec((1, T, C), lambda b: (b, 0, 0)),
        ),
        compiler_params=pltpu.CompilerParams(
            dimension_semantics=("parallel",)),     # batch rows are independent
        cost_estimate=pl.CostEstimate(
            flops=int(flops),
            transcendentals=int(transcendentals),
            bytes_accessed=int(bytes_accessed)),
    )(x, ln1g, ln1b, wqkv, wp_bf, bp, ln2g, ln2b, w1_bf, b1, w2_bf, b2)


def reference_block(x, params, n_head):
    (ln1g, ln1b, wq, wk, wv, wp, bp, ln2g, ln2b, w1, b1, w2, b2) = params
    B, T, C = x.shape
    hs = C // n_head
    h = _layernorm(x, ln1g, ln1b)
    q = h @ wq
    k = h @ wk
    v = h @ wv
    q = q.reshape(B, T, n_head, hs).transpose(0, 2, 1, 3)
    k = k.reshape(B, T, n_head, hs).transpose(0, 2, 1, 3)
    v = v.reshape(B, T, n_head, hs).transpose(0, 2, 1, 3)
    wei = jnp.einsum("bhqd,bhkd->bhqk", q, k) * hs ** (-0.5)
    mask = jnp.tril(jnp.ones((T, T), bool))
    wei = jnp.where(mask, wei, -jnp.inf)
    p = jax.nn.softmax(wei, axis=-1)
    attn = jnp.einsum("bhqk,bhkd->bhqd", p, v).transpose(0, 2, 1, 3).reshape(B, T, C)
    x1 = x + attn @ wp + bp
    h2 = _layernorm(x1, ln2g, ln2b)
    ff = jnp.maximum(h2 @ w1 + b1, 0.0) @ w2 + b2
    return x1 + ff


def make_params(key, C):
    ks = jax.random.split(key, 8)
    init = lambda k, shape, scale=0.02: scale * jax.random.normal(k, shape, jnp.float32)
    params = (
        jnp.ones((1, C), jnp.float32),                 # ln1 gamma
        jnp.zeros((1, C), jnp.float32),                # ln1 beta
        init(ks[0], (C, C)),                           # Wq  (in, out) = concat of heads
        init(ks[1], (C, C)),                           # Wk
        init(ks[2], (C, C)),                           # Wv
        init(ks[3], (C, C)),                           # Wproj (transposed)
        init(ks[4], (1, C)),                           # bproj
        jnp.ones((1, C), jnp.float32),                 # ln2 gamma
        jnp.zeros((1, C), jnp.float32),                # ln2 beta
        init(ks[5], (C, 4 * C)),                       # W1 (transposed)
        init(ks[6], (1, 4 * C)),                       # b1
        init(ks[7], (4 * C, C)),                       # W2 (transposed)
        jnp.zeros((1, C), jnp.float32),                # b2
    )
    return params


if __name__ == "__main__":
    B, T, C, n_head = 2, 8, 32, 4
    key = jax.random.PRNGKey(0)
    kx, kp = jax.random.split(key)
    x = jax.random.normal(kx, (B, T, C), jnp.float32)
    params = make_params(kp, C)

    out = transformer_block(x, params, n_head)
    out = jax.block_until_ready(out)

    ref = reference_block(x, params, n_head)
    assert out.shape == (B, T, C)
    err = float(jnp.max(jnp.abs(out - ref)))
    # Tolerance accounts for bf16 MXU inputs + approx EUP reciprocal.
    assert jnp.allclose(out, ref, atol=2e-2, rtol=2e-2), f"mismatch vs JAX reference (max|err|={err})"
    print("KERNEL_OK")
</pallas_src>

<mosaic_0001>
module attributes {stable_mosaic.version = 11 : i64} {
  func.func @block_kernel(%arg0: i32, %arg1: memref<1x8x32xf32, #tpu.memory_space<vmem>>, %arg2: memref<1x32xf32, #tpu.memory_space<vmem>>, %arg3: memref<1x32xf32, #tpu.memory_space<vmem>>, %arg4: memref<32x96xbf16, #tpu.memory_space<vmem>>, %arg5: memref<32x32xbf16, #tpu.memory_space<vmem>>, %arg6: memref<1x32xf32, #tpu.memory_space<vmem>>, %arg7: memref<1x32xf32, #tpu.memory_space<vmem>>, %arg8: memref<1x32xf32, #tpu.memory_space<vmem>>, %arg9: memref<32x128xbf16, #tpu.memory_space<vmem>>, %arg10: memref<1x128xf32, #tpu.memory_space<vmem>>, %arg11: memref<128x32xbf16, #tpu.memory_space<vmem>>, %arg12: memref<1x32xf32, #tpu.memory_space<vmem>>, %arg13: memref<1x8x32xf32, #tpu.memory_space<vmem>>) attributes {dimension_semantics = [#tpu.dimension_semantics<parallel>], iteration_bounds = array<i64: 2>, scalar_prefetch = 0 : i64, scratch_operands = 0 : i64, tpu.core_type = #tpu.core_type<tc>, window_params = [{transform_indices = @transform_0, window_bounds = array<i64: 1, 8, 32>}, {pipeline_mode = #tpu.pipeline_mode<synchronous>, transform_indices = @transform_1, window_bounds = array<i64: 1, 32>}, {pipeline_mode = #tpu.pipeline_mode<synchronous>, transform_indices = @transform_2, window_bounds = array<i64: 1, 32>}, {pipeline_mode = #tpu.pipeline_mode<synchronous>, transform_indices = @transform_3, window_bounds = array<i64: 32, 96>}, {pipeline_mode = #tpu.pipeline_mode<synchronous>, transform_indices = @transform_4, window_bounds = array<i64: 32, 32>}, {pipeline_mode = #tpu.pipeline_mode<synchronous>, transform_indices = @transform_5, window_bounds = array<i64: 1, 32>}, {pipeline_mode = #tpu.pipeline_mode<synchronous>, transform_indices = @transform_6, window_bounds = array<i64: 1, 32>}, {pipeline_mode = #tpu.pipeline_mode<synchronous>, transform_indices = @transform_7, window_bounds = array<i64: 1, 32>}, {pipeline_mode = #tpu.pipeline_mode<synchronous>, transform_indices = @transform_8, window_bounds = array<i64: 32, 128>}, {pipeline_mode = #tpu.pipeline_mode<synchronous>, transform_indices = @transform_9, window_bounds = array<i64: 1, 128>}, {pipeline_mode = #tpu.pipeline_mode<synchronous>, transform_indices = @transform_10, window_bounds = array<i64: 128, 32>}, {pipeline_mode = #tpu.pipeline_mode<synchronous>, transform_indices = @transform_11, window_bounds = array<i64: 1, 32>}, {transform_indices = @transform_12, window_bounds = array<i64: 1, 8, 32>}]} {
    %c0 = arith.constant 0 : index
    %c0_0 = arith.constant 0 : index
    %c0_1 = arith.constant 0 : index
    %0 = vector.load %arg1[%c0, %c0_0, %c0_1] : memref<1x8x32xf32, #tpu.memory_space<vmem>>, vector<1x8x32xf32>
    %1 = vector.shape_cast %0 : vector<1x8x32xf32> to vector<8x32xf32>
    %c0_2 = arith.constant 0 : index
    %c0_3 = arith.constant 0 : index
    %2 = vector.load %arg2[%c0_2, %c0_3] : memref<1x32xf32, #tpu.memory_space<vmem>>, vector<1x32xf32>
    %c0_4 = arith.constant 0 : index
    %c0_5 = arith.constant 0 : index
    %3 = vector.load %arg3[%c0_4, %c0_5] : memref<1x32xf32, #tpu.memory_space<vmem>>, vector<1x32xf32>
    %cst = arith.constant dense<0.000000e+00> : vector<8xf32>
    %4 = vector.multi_reduction <add>, %1, %cst [1] : vector<8x32xf32> to vector<8xf32>
    %5 = vector.shape_cast %4 : vector<8xf32> to vector<8x1xf32>
    %cst_6 = arith.constant 3.200000e+01 : f32
    %6 = vector.broadcast %cst_6 : f32 to vector<8x1xf32>
    %7 = arith.divf %5, %6 : vector<8x1xf32>
    %8 = vector.broadcast %7 : vector<8x1xf32> to vector<8x32xf32>
    %9 = arith.subf %1, %8 : vector<8x32xf32>
    %10 = arith.mulf %9, %9 : vector<8x32xf32>
    %cst_7 = arith.constant dense<0.000000e+00> : vector<8xf32>
    %11 = vector.multi_reduction <add>, %10, %cst_7 [1] : vector<8x32xf32> to vector<8xf32>
    %12 = vector.shape_cast %11 : vector<8xf32> to vector<8x1xf32>
    %cst_8 = arith.constant 3.200000e+01 : f32
    %13 = vector.broadcast %cst_8 : f32 to vector<8x1xf32>
    %14 = arith.divf %12, %13 : vector<8x1xf32>
    %15 = vector.broadcast %7 : vector<8x1xf32> to vector<8x32xf32>
    %16 = arith.subf %1, %15 : vector<8x32xf32>
    %cst_9 = arith.constant 9.99999974E-6 : f32
    %17 = vector.broadcast %cst_9 : f32 to vector<8x1xf32>
    %18 = arith.addf %14, %17 : vector<8x1xf32>
    %19 = math.rsqrt %18 : vector<8x1xf32>
    %20 = vector.broadcast %19 : vector<8x1xf32> to vector<8x32xf32>
    %21 = arith.mulf %16, %20 : vector<8x32xf32>
    %22 = vector.broadcast %2 : vector<1x32xf32> to vector<8x32xf32>
    %23 = arith.mulf %21, %22 : vector<8x32xf32>
    %24 = vector.broadcast %3 : vector<1x32xf32> to vector<8x32xf32>
    %25 = arith.addf %23, %24 : vector<8x32xf32>
    %26 = arith.truncf %25 : vector<8x32xf32> to vector<8x32xbf16>
    %c0_10 = arith.constant 0 : index
    %c0_11 = arith.constant 0 : index
    %27 = vector.load %arg4[%c0_10, %c0_11] : memref<32x96xbf16, #tpu.memory_space<vmem>>, vector<32x96xbf16>
    %cst_12 = arith.constant dense<0.000000e+00> : vector<8x96xf32>
    %28 = tpu.matmul %26, %27, %cst_12 {dimension_numbers = #tpu.dot_dimension_numbers<[1], [0], [0], [1], [0, 0, 1, 1], [], []>} : vector<8x32xbf16>, vector<32x96xbf16>, vector<8x96xf32> -> vector<8x96xf32>
    %29 = arith.truncf %28 : vector<8x96xf32> to vector<8x96xbf16>
    %30 = vector.extract_strided_slice %29 {offsets = [0, 0], sizes = [8, 8], strides = [1, 1]} : vector<8x96xbf16> to vector<8x8xbf16>
    %31 = vector.extract_strided_slice %29 {offsets = [0, 8], sizes = [8, 8], strides = [1, 1]} : vector<8x96xbf16> to vector<8x8xbf16>
    %32 = vector.extract_strided_slice %29 {offsets = [0, 16], sizes = [8, 8], strides = [1, 1]} : vector<8x96xbf16> to vector<8x8xbf16>
    %33 = vector.extract_strided_slice %29 {offsets = [0, 24], sizes = [8, 8], strides = [1, 1]} : vector<8x96xbf16> to vector<8x8xbf16>
    %34 = vector.shape_cast %30 : vector<8x8xbf16> to vector<1x8x8xbf16>
    %35 = vector.shape_cast %31 : vector<8x8xbf16> to vector<1x8x8xbf16>
    %36 = vector.shape_cast %32 : vector<8x8xbf16> to vector<1x8x8xbf16>
    %37 = vector.shape_cast %33 : vector<8x8xbf16> to vector<1x8x8xbf16>
    %38 = tpu.concatenate %34, %35, %36, %37 in 0 : vector<1x8x8xbf16>, vector<1x8x8xbf16>, vector<1x8x8xbf16>, vector<1x8x8xbf16> -> vector<4x8x8xbf16>
    %39 = vector.extract_strided_slice %29 {offsets = [0, 32], sizes = [8, 8], strides = [1, 1]} : vector<8x96xbf16> to vector<8x8xbf16>
    %40 = vector.extract_strided_slice %29 {offsets = [0, 40], sizes = [8, 8], strides = [1, 1]} : vector<8x96xbf16> to vector<8x8xbf16>
    %41 = vector.extract_strided_slice %29 {offsets = [0, 48], sizes = [8, 8], strides = [1, 1]} : vector<8x96xbf16> to vector<8x8xbf16>
    %42 = vector.extract_strided_slice %29 {offsets = [0, 56], sizes = [8, 8], strides = [1, 1]} : vector<8x96xbf16> to vector<8x8xbf16>
    %43 = vector.shape_cast %39 : vector<8x8xbf16> to vector<1x8x8xbf16>
    %44 = vector.shape_cast %40 : vector<8x8xbf16> to vector<1x8x8xbf16>
    %45 = vector.shape_cast %41 : vector<8x8xbf16> to vector<1x8x8xbf16>
    %46 = vector.shape_cast %42 : vector<8x8xbf16> to vector<1x8x8xbf16>
    %47 = tpu.concatenate %43, %44, %45, %46 in 0 : vector<1x8x8xbf16>, vector<1x8x8xbf16>, vector<1x8x8xbf16>, vector<1x8x8xbf16> -> vector<4x8x8xbf16>
    %48 = vector.extract_strided_slice %29 {offsets = [0, 64], sizes = [8, 8], strides = [1, 1]} : vector<8x96xbf16> to vector<8x8xbf16>
    %49 = vector.extract_strided_slice %29 {offsets = [0, 72], sizes = [8, 8], strides = [1, 1]} : vector<8x96xbf16> to vector<8x8xbf16>
    %50 = vector.extract_strided_slice %29 {offsets = [0, 80], sizes = [8, 8], strides = [1, 1]} : vector<8x96xbf16> to vector<8x8xbf16>
    %51 = vector.extract_strided_slice %29 {offsets = [0, 88], sizes = [8, 8], strides = [1, 1]} : vector<8x96xbf16> to vector<8x8xbf16>
    %52 = vector.shape_cast %48 : vector<8x8xbf16> to vector<1x8x8xbf16>
    %53 = vector.shape_cast %49 : vector<8x8xbf16> to vector<1x8x8xbf16>
    %54 = vector.shape_cast %50 : vector<8x8xbf16> to vector<1x8x8xbf16>
    %55 = vector.shape_cast %51 : vector<8x8xbf16> to vector<1x8x8xbf16>
    %56 = tpu.concatenate %52, %53, %54, %55 in 0 : vector<1x8x8xbf16>, vector<1x8x8xbf16>, vector<1x8x8xbf16>, vector<1x8x8xbf16> -> vector<4x8x8xbf16>
    %57 = tpu.iota {dimensions = array<i32: 0>} : vector<8x8xi32>
    %58 = tpu.iota {dimensions = array<i32: 1>} : vector<8x8xi32>
    %59 = arith.cmpi sge, %57, %58 : vector<8x8xi32>
    %60 = vector.shape_cast %59 : vector<8x8xi1> to vector<1x8x8xi1>
    "tpu.trace_start"() <{level = 10 : i32, message = "hqd,hkd->hqk"}> : () -> ()
    %cst_13 = arith.constant dense<0.000000e+00> : vector<4x8x8xf32>
    %61 = tpu.matmul %38, %47, %cst_13 {dimension_numbers = #tpu.dot_dimension_numbers<[2], [2], [1], [1], [0, 0, 0, 1, 1, 1], [0], [0]>} : vector<4x8x8xbf16>, vector<4x8x8xbf16>, vector<4x8x8xf32> -> vector<4x8x8xf32>
    "tpu.trace_stop"() : () -> ()
    %cst_14 = arith.constant 0.353553385 : f32
    %62 = vector.broadcast %cst_14 : f32 to vector<4x8x8xf32>
    %63 = arith.mulf %61, %62 : vector<4x8x8xf32>
    %cst_15 = arith.constant 0xFF800000 : f32
    %64 = vector.shape_cast %60 : vector<1x8x8xi1> to vector<1x8x8xi1>
    %65 = vector.broadcast %64 : vector<1x8x8xi1> to vector<4x8x8xi1>
    %66 = vector.broadcast %cst_15 : f32 to vector<4x8x8xf32>
    %67 = arith.select %65, %63, %66 : vector<4x8x8xi1>, vector<4x8x8xf32>
    %cst_16 = arith.constant dense<0xFF800000> : vector<4x8xf32>
    %68 = vector.multi_reduction <maximumf>, %67, %cst_16 [2] : vector<4x8x8xf32> to vector<4x8xf32>
    %69 = vector.shape_cast %68 : vector<4x8xf32> to vector<4x8x1xf32>
    %70 = vector.broadcast %69 : vector<4x8x1xf32> to vector<4x8x8xf32>
    %71 = arith.subf %67, %70 : vector<4x8x8xf32>
    %72 = math.exp %71 : vector<4x8x8xf32>
    %cst_17 = arith.constant dense<0.000000e+00> : vector<4x8xf32>
    %73 = vector.multi_reduction <add>, %72, %cst_17 [2] : vector<4x8x8xf32> to vector<4x8xf32>
    %74 = vector.shape_cast %73 : vector<4x8xf32> to vector<4x8x1xf32>
    %75 = tpu.reciprocal %74 {approx = true} : vector<4x8x1xf32> -> vector<4x8x1xf32>
    %76 = vector.broadcast %75 : vector<4x8x1xf32> to vector<4x8x8xf32>
    %77 = arith.mulf %72, %76 : vector<4x8x8xf32>
    %78 = arith.truncf %77 : vector<4x8x8xf32> to vector<4x8x8xbf16>
    "tpu.trace_start"() <{level = 10 : i32, message = "hqk,hkd->hqd"}> : () -> ()
    %cst_18 = arith.constant dense<0.000000e+00> : vector<4x8x8xf32>
    %79 = tpu.matmul %78, %56, %cst_18 {dimension_numbers = #tpu.dot_dimension_numbers<[2], [1], [1], [2], [0, 0, 0, 1, 1, 2], [0], [0]>} : vector<4x8x8xbf16>, vector<4x8x8xbf16>, vector<4x8x8xf32> -> vector<4x8x8xf32>
    "tpu.trace_stop"() : () -> ()
    %80 = vector.extract_strided_slice %79 {offsets = [0, 0, 0], sizes = [1, 8, 8], strides = [1, 1, 1]} : vector<4x8x8xf32> to vector<1x8x8xf32>
    %81 = vector.shape_cast %80 : vector<1x8x8xf32> to vector<8x8xf32>
    %82 = vector.extract_strided_slice %79 {offsets = [1, 0, 0], sizes = [1, 8, 8], strides = [1, 1, 1]} : vector<4x8x8xf32> to vector<1x8x8xf32>
    %83 = vector.shape_cast %82 : vector<1x8x8xf32> to vector<8x8xf32>
    %84 = vector.extract_strided_slice %79 {offsets = [2, 0, 0], sizes = [1, 8, 8], strides = [1, 1, 1]} : vector<4x8x8xf32> to vector<1x8x8xf32>
    %85 = vector.shape_cast %84 : vector<1x8x8xf32> to vector<8x8xf32>
    %86 = vector.extract_strided_slice %79 {offsets = [3, 0, 0], sizes = [1, 8, 8], strides = [1, 1, 1]} : vector<4x8x8xf32> to vector<1x8x8xf32>
    %87 = vector.shape_cast %86 : vector<1x8x8xf32> to vector<8x8xf32>
    %88 = tpu.concatenate %81, %83, %85, %87 in 1 : vector<8x8xf32>, vector<8x8xf32>, vector<8x8xf32>, vector<8x8xf32> -> vector<8x32xf32>
    %89 = arith.truncf %88 : vector<8x32xf32> to vector<8x32xbf16>
    %c0_19 = arith.constant 0 : index
    %c0_20 = arith.constant 0 : index
    %90 = vector.load %arg5[%c0_19, %c0_20] : memref<32x32xbf16, #tpu.memory_space<vmem>>, vector<32x32xbf16>
    %cst_21 = arith.constant dense<0.000000e+00> : vector<8x32xf32>
    %91 = tpu.matmul %89, %90, %cst_21 {dimension_numbers = #tpu.dot_dimension_numbers<[1], [0], [0], [1], [0, 0, 1, 1], [], []>} : vector<8x32xbf16>, vector<32x32xbf16>, vector<8x32xf32> -> vector<8x32xf32>
    %c0_22 = arith.constant 0 : index
    %c0_23 = arith.constant 0 : index
    %92 = vector.load %arg6[%c0_22, %c0_23] : memref<1x32xf32, #tpu.memory_space<vmem>>, vector<1x32xf32>
    %93 = vector.broadcast %92 : vector<1x32xf32> to vector<8x32xf32>
    %94 = arith.addf %91, %93 : vector<8x32xf32>
    %95 = arith.addf %1, %94 : vector<8x32xf32>
    %c0_24 = arith.constant 0 : index
    %c0_25 = arith.constant 0 : index
    %96 = vector.load %arg7[%c0_24, %c0_25] : memref<1x32xf32, #tpu.memory_space<vmem>>, vector<1x32xf32>
    %c0_26 = arith.constant 0 : index
    %c0_27 = arith.constant 0 : index
    %97 = vector.load %arg8[%c0_26, %c0_27] : memref<1x32xf32, #tpu.memory_space<vmem>>, vector<1x32xf32>
    %cst_28 = arith.constant dense<0.000000e+00> : vector<8xf32>
    %98 = vector.multi_reduction <add>, %95, %cst_28 [1] : vector<8x32xf32> to vector<8xf32>
    %99 = vector.shape_cast %98 : vector<8xf32> to vector<8x1xf32>
    %cst_29 = arith.constant 3.200000e+01 : f32
    %100 = vector.broadcast %cst_29 : f32 to vector<8x1xf32>
    %101 = arith.divf %99, %100 : vector<8x1xf32>
    %102 = vector.broadcast %101 : vector<8x1xf32> to vector<8x32xf32>
    %103 = arith.subf %95, %102 : vector<8x32xf32>
    %104 = arith.mulf %103, %103 : vector<8x32xf32>
    %cst_30 = arith.constant dense<0.000000e+00> : vector<8xf32>
    %105 = vector.multi_reduction <add>, %104, %cst_30 [1] : vector<8x32xf32> to vector<8xf32>
    %106 = vector.shape_cast %105 : vector<8xf32> to vector<8x1xf32>
    %cst_31 = arith.constant 3.200000e+01 : f32
    %107 = vector.broadcast %cst_31 : f32 to vector<8x1xf32>
    %108 = arith.divf %106, %107 : vector<8x1xf32>
    %109 = vector.broadcast %101 : vector<8x1xf32> to vector<8x32xf32>
    %110 = arith.subf %95, %109 : vector<8x32xf32>
    %cst_32 = arith.constant 9.99999974E-6 : f32
    %111 = vector.broadcast %cst_32 : f32 to vector<8x1xf32>
    %112 = arith.addf %108, %111 : vector<8x1xf32>
    %113 = math.rsqrt %112 : vector<8x1xf32>
    %114 = vector.broadcast %113 : vector<8x1xf32> to vector<8x32xf32>
    %115 = arith.mulf %110, %114 : vector<8x32xf32>
    %116 = vector.broadcast %96 : vector<1x32xf32> to vector<8x32xf32>
    %117 = arith.mulf %115, %116 : vector<8x32xf32>
    %118 = vector.broadcast %97 : vector<1x32xf32> to vector<8x32xf32>
    %119 = arith.addf %117, %118 : vector<8x32xf32>
    %120 = arith.truncf %119 : vector<8x32xf32> to vector<8x32xbf16>
    %c0_33 = arith.constant 0 : index
    %c0_34 = arith.constant 0 : index
    %121 = vector.load %arg9[%c0_33, %c0_34] : memref<32x128xbf16, #tpu.memory_space<vmem>>, vector<32x128xbf16>
    %cst_35 = arith.constant dense<0.000000e+00> : vector<8x128xf32>
    %122 = tpu.matmul %120, %121, %cst_35 {dimension_numbers = #tpu.dot_dimension_numbers<[1], [0], [0], [1], [0, 0, 1, 1], [], []>} : vector<8x32xbf16>, vector<32x128xbf16>, vector<8x128xf32> -> vector<8x128xf32>
    %c0_36 = arith.constant 0 : index
    %c0_37 = arith.constant 0 : index
    %123 = vector.load %arg10[%c0_36, %c0_37] : memref<1x128xf32, #tpu.memory_space<vmem>>, vector<1x128xf32>
    %124 = vector.broadcast %123 : vector<1x128xf32> to vector<8x128xf32>
    %125 = arith.addf %122, %124 : vector<8x128xf32>
    %cst_38 = arith.constant 0.000000e+00 : f32
    %126 = vector.broadcast %cst_38 : f32 to vector<8x128xf32>
    %127 = arith.maximumf %125, %126 : vector<8x128xf32>
    %128 = arith.truncf %127 : vector<8x128xf32> to vector<8x128xbf16>
    %c0_39 = arith.constant 0 : index
    %c0_40 = arith.constant 0 : index
    %129 = vector.load %arg11[%c0_39, %c0_40] : memref<128x32xbf16, #tpu.memory_space<vmem>>, vector<128x32xbf16>
    %cst_41 = arith.constant dense<0.000000e+00> : vector<8x32xf32>
    %130 = tpu.matmul %128, %129, %cst_41 {dimension_numbers = #tpu.dot_dimension_numbers<[1], [0], [0], [1], [0, 0, 1, 1], [], []>} : vector<8x128xbf16>, vector<128x32xbf16>, vector<8x32xf32> -> vector<8x32xf32>
    %c0_42 = arith.constant 0 : index
    %c0_43 = arith.constant 0 : index
    %131 = vector.load %arg12[%c0_42, %c0_43] : memref<1x32xf32, #tpu.memory_space<vmem>>, vector<1x32xf32>
    %132 = vector.broadcast %131 : vector<1x32xf32> to vector<8x32xf32>
    %133 = arith.addf %130, %132 : vector<8x32xf32>
    %134 = arith.addf %95, %133 : vector<8x32xf32>
    %c0_44 = arith.constant 0 : index
    %c0_45 = arith.constant 0 : index
    %c0_46 = arith.constant 0 : index
    %135 = vector.load %arg13[%c0_44, %c0_45, %c0_46] : memref<1x8x32xf32, #tpu.memory_space<vmem>>, vector<1x8x32xf32>
    %136 = vector.shape_cast %135 : vector<1x8x32xf32> to vector<8x32xf32>
    %137 = vector.shape_cast %134 : vector<8x32xf32> to vector<1x8x32xf32>
    tpu.vector_store %arg13[%c0_44, %c0_45, %c0_46], %137 {strides = array<i32>} : memref<1x8x32xf32, #tpu.memory_space<vmem>>, vector<1x8x32xf32>,
    return
  }
  func.func @transform_0(%arg0: i32) -> (i32, i32, i32) {
    %c0_i32 = arith.constant 0 : i32
    %c0_i32_0 = arith.constant 0 : i32
    %c0_i32_1 = arith.constant 0 : i32
    return %arg0, %c0_i32, %c0_i32_0 : i32, i32, i32
  }
  func.func @transform_1(%arg0: i32) -> (i32, i32) {
    %c0_i32 = arith.constant 0 : i32
    %c0_i32_0 = arith.constant 0 : i32
    %c0_i32_1 = arith.constant 0 : i32
    return %c0_i32, %c0_i32_0 : i32, i32
  }
  func.func @transform_2(%arg0: i32) -> (i32, i32) {
    %c0_i32 = arith.constant 0 : i32
    %c0_i32_0 = arith.constant 0 : i32
    %c0_i32_1 = arith.constant 0 : i32
    return %c0_i32, %c0_i32_0 : i32, i32
  }
  func.func @transform_3(%arg0: i32) -> (i32, i32) {
    %c0_i32 = arith.constant 0 : i32
    %c0_i32_0 = arith.constant 0 : i32
    %c0_i32_1 = arith.constant 0 : i32
    return %c0_i32, %c0_i32_0 : i32, i32
  }
  func.func @transform_4(%arg0: i32) -> (i32, i32) {
    %c0_i32 = arith.constant 0 : i32
    %c0_i32_0 = arith.constant 0 : i32
    %c0_i32_1 = arith.constant 0 : i32
    return %c0_i32, %c0_i32_0 : i32, i32
  }
  func.func @transform_5(%arg0: i32) -> (i32, i32) {
    %c0_i32 = arith.constant 0 : i32
    %c0_i32_0 = arith.constant 0 : i32
    %c0_i32_1 = arith.constant 0 : i32
    return %c0_i32, %c0_i32_0 : i32, i32
  }
  func.func @transform_6(%arg0: i32) -> (i32, i32) {
    %c0_i32 = arith.constant 0 : i32
    %c0_i32_0 = arith.constant 0 : i32
    %c0_i32_1 = arith.constant 0 : i32
    return %c0_i32, %c0_i32_0 : i32, i32
  }
  func.func @transform_7(%arg0: i32) -> (i32, i32) {
    %c0_i32 = arith.constant 0 : i32
    %c0_i32_0 = arith.constant 0 : i32
    %c0_i32_1 = arith.constant 0 : i32
    return %c0_i32, %c0_i32_0 : i32, i32
  }
  func.func @transform_8(%arg0: i32) -> (i32, i32) {
    %c0_i32 = arith.constant 0 : i32
    %c0_i32_0 = arith.constant 0 : i32
    %c0_i32_1 = arith.constant 0 : i32
    return %c0_i32, %c0_i32_0 : i32, i32
  }
  func.func @transform_9(%arg0: i32) -> (i32, i32) {
    %c0_i32 = arith.constant 0 : i32
    %c0_i32_0 = arith.constant 0 : i32
    %c0_i32_1 = arith.constant 0 : i32
    return %c0_i32, %c0_i32_0 : i32, i32
  }
  func.func @transform_10(%arg0: i32) -> (i32, i32) {
    %c0_i32 = arith.constant 0 : i32
    %c0_i32_0 = arith.constant 0 : i32
    %c0_i32_1 = arith.constant 0 : i32
    return %c0_i32, %c0_i32_0 : i32, i32
  }
  func.func @transform_11(%arg0: i32) -> (i32, i32) {
    %c0_i32 = arith.constant 0 : i32
    %c0_i32_0 = arith.constant 0 : i32
    %c0_i32_1 = arith.constant 0 : i32
    return %c0_i32, %c0_i32_0 : i32, i32
  }
  func.func @transform_12(%arg0: i32) -> (i32, i32, i32) {
    %c0_i32 = arith.constant 0 : i32
    %c0_i32_0 = arith.constant 0 : i32
    %c0_i32_1 = arith.constant 0 : i32
    return %arg0, %c0_i32, %c0_i32_0 : i32, i32, i32
  }
}

</mosaic_0001>

<llo_original>
// kernel: tpu_custom_call.1
$region0: #{tpu_custom_call.1}
  #allocation0 [shape = 'u32[]', space=smem, size = 0x4, offset = 0x4, fixed_abs, tag = 'smem constant byte address 0x4 - core index']
  #allocation1 [shape = 'u32[144,128]{1,0:T(1,128)}', space=vmem, size = 0x12000, scoped, tag = 'internal scratch']
  %s0 = inlined_call_operand.vmem [shape: f32[2,8,32], index: 0, kind: input, shape index: {}]
  %s1 = inlined_call_operand.vmem [shape: f32[1,32], index: 1, kind: input, shape index: {}]
  %s2 = inlined_call_operand.vmem [shape: f32[1,32], index: 2, kind: input, shape index: {}]
  %s3 = inlined_call_operand.vmem [shape: bf16[32,96], index: 3, kind: input, shape index: {}]
  %s4 = inlined_call_operand.vmem [shape: bf16[32,32], index: 4, kind: input, shape index: {}]
  %s5 = inlined_call_operand.vmem [shape: f32[1,32], index: 5, kind: input, shape index: {}]
  %s6 = inlined_call_operand.vmem [shape: f32[1,32], index: 6, kind: input, shape index: {}]
  %s7 = inlined_call_operand.vmem [shape: f32[1,32], index: 7, kind: input, shape index: {}]
  %s8 = inlined_call_operand.vmem [shape: bf16[32,128], index: 8, kind: input, shape index: {}]
  %s9 = inlined_call_operand.vmem [shape: f32[1,128], index: 9, kind: input, shape index: {}]
  %s10 = inlined_call_operand.vmem [shape: bf16[128,32], index: 10, kind: input, shape index: {}]
  %s11 = inlined_call_operand.vmem [shape: f32[1,32], index: 11, kind: input, shape index: {}]
  %s12 = inlined_call_operand.hbm [shape: f32[2,8,32], index: 12, kind: output, shape index: {}]
  %s13 = sld [smem:[#allocation0]]
  $region81: #{tpu_custom_call.1} parent=0
    _
  %s15 = ssub.s32 1, %s13
  %s16 = scalar_select 0, %s15, %s13
  $region1: #{tpu_custom_call.1} parent=0
    #allocation2 [shape = 'u8[8192]{0}', space=vmem, size = 0x2000, scoped, tag = 'output window, operand 0']
    #allocation3 [shape = 's32[2]{0}', space=sflag, size = 0x8, scoped, tag = 'scoped memory for tpu_custom_call.1']
    %17 = vsyncpa [#allocation3], 0
    %s18 = scalar_lea.sflag [#allocation3], 1
    %19 = vsyncpa %s18, 0
    loop: start=0, step=1, limit=4
    $region2: #{tpu_custom_call.1} parent=1 // loop_pre_header
      _
    $region3: #{tpu_custom_call.1} parent=1 // loop_header
      %s21 = sphi 0, %s25
      %p22 = scmp.ge.s32.totalorder %s21, 4
      %s31 = sphi 0, %s33
      %s34 = sphi 0, %s31
      %s35 = sphi 0, %s34
      %s51 = sphi 0, %s35
      %s55 = sphi 0, %s55
      %s57 = sphi 0, %s55
      %s58 = sphi 0, %s57
      %s72 = sphi 0, %s58
      %s76 = sphi 0, %s76
      %s78 = sphi 0, %s76
      %s79 = sphi 0, %s78
      %s93 = sphi 0, %s79
      %s97 = sphi 0, %s97
      %s99 = sphi 0, %s97
      %s100 = sphi 0, %s99
      %s114 = sphi 0, %s100
      %s118 = sphi 0, %s118
      %s120 = sphi 0, %s118
      %s121 = sphi 0, %s120
      %s135 = sphi 0, %s121
      %s139 = sphi 0, %s139
      %s141 = sphi 0, %s139
      %s142 = sphi 0, %s141
      %s156 = sphi 0, %s142
      %s160 = sphi 0, %s160
      %s162 = sphi 0, %s160
      %s163 = sphi 0, %s162
      %s177 = sphi 0, %s163
      %s181 = sphi 0, %s181
      %s183 = sphi 0, %s181
      %s184 = sphi 0, %s183
      %s198 = sphi 0, %s184
      %s202 = sphi 0, %s202
      %s204 = sphi 0, %s202
      %s205 = sphi 0, %s204
      %s219 = sphi 0, %s205
      %s223 = sphi 0, %s223
      %s225 = sphi 0, %s223
      %s226 = sphi 0, %s225
      %s240 = sphi 0, %s226
      %s244 = sphi 0, %s244
      %s246 = sphi 0, %s244
      %s247 = sphi 0, %s246
      %s261 = sphi 0, %s247
      %s265 = sphi 0, %s265
      %s267 = sphi 0, %s265
      %s268 = sphi 0, %s267
      %s282 = sphi 0, %s268
      %s288 = sphi 0, %s290
      %s291 = sphi 0, %s288
      %s292 = sphi 0, %s291
      %s308 = sphi 0, %s292
    $region4: #{tpu_custom_call.1} parent=1 // loop_header_branch
      %24 = sbr.rel (%p22) target = $region8
    $region5: #{tpu_custom_call.1} parent=1 // loop_body
      %s26 = ssub.s32 %s21, 1
      %s27 = ssub.s32 %s21, 2
      %s28 = sadd.s32 %s21, 1
      %s29 = ssub.s32 %s21, %s28
      %p30 = scmp.eq.s32.totalorder %s29, 0
      %s32 = sadd.s32 %s31, 1
      %s33 = scalar_select %p30, %s31, %s32
      %p36 = pneg %p30
      %p37 = scmp.eq.s32.totalorder %s21, 1
      %p38 = por %p36, %p37
      %p39 = scmp.ne.s32.totalorder %s31, %s34
      %p40 = scmp.eq.s32.totalorder %s21, 0
      %p41 = por %p39, %p40
      %p42 = scmp.ne.s32.totalorder %s31, %s34
      %p43 = scmp.eq.s32.totalorder %s26, 1
      %p44 = por %p42, %p43
      %p45 = scmp.ne.s32.totalorder %s34, %s35
      %p46 = scmp.eq.s32.totalorder %s26, 0
      %p47 = por %p45, %p46
      %p48 = scmp.ne.s32.totalorder %s34, %s35
      %p49 = scmp.eq.s32.totalorder %s27, 1
      %p50 = por %p48, %p49
      %p52 = scmp.ne.s32.totalorder %s35, %s51
      %p53 = scmp.eq.s32.totalorder %s27, 0
      %p54 = por %p52, %p53
      %s56 = sadd.s32 %s55, 1
      %p59 = scmp.eq.s32.totalorder %s21, 1
      %p60 = scmp.ne.s32.totalorder %s55, %s57
      %p61 = scmp.eq.s32.totalorder %s21, 0
      %p62 = por %p60, %p61
      %p63 = scmp.ne.s32.totalorder %s55, %s57
      %p64 = scmp.eq.s32.totalorder %s26, 1
      %p65 = por %p63, %p64
      %p66 = scmp.ne.s32.totalorder %s57, %s58
      %p67 = scmp.eq.s32.totalorder %s26, 0
      %p68 = por %p66, %p67
      %p69 = scmp.ne.s32.totalorder %s57, %s58
      %p70 = scmp.eq.s32.totalorder %s27, 1
      %p71 = por %p69, %p70
      %p73 = scmp.ne.s32.totalorder %s58, %s72
      %p74 = scmp.eq.s32.totalorder %s27, 0
      %p75 = por %p73, %p74
      %s77 = sadd.s32 %s76, 1
      %p80 = scmp.eq.s32.totalorder %s21, 1
      %p81 = scmp.ne.s32.totalorder %s76, %s78
      %p82 = scmp.eq.s32.totalorder %s21, 0
      %p83 = por %p81, %p82
      %p84 = scmp.ne.s32.totalorder %s76, %s78
      %p85 = scmp.eq.s32.totalorder %s26, 1
      %p86 = por %p84, %p85
      %p87 = scmp.ne.s32.totalorder %s78, %s79
      %p88 = scmp.eq.s32.totalorder %s26, 0
      %p89 = por %p87, %p88
      %p90 = scmp.ne.s32.totalorder %s78, %s79
      %p91 = scmp.eq.s32.totalorder %s27, 1
      %p92 = por %p90, %p91
      %p94 = scmp.ne.s32.totalorder %s79, %s93
      %p95 = scmp.eq.s32.totalorder %s27, 0
      %p96 = por %p94, %p95
      %s98 = sadd.s32 %s97, 1
      %p101 = scmp.eq.s32.totalorder %s21, 1
      %p102 = scmp.ne.s32.totalorder %s97, %s99
      %p103 = scmp.eq.s32.totalorder %s21, 0
      %p104 = por %p102, %p103
      %p105 = scmp.ne.s32.totalorder %s97, %s99
      %p106 = scmp.eq.s32.totalorder %s26, 1
      %p107 = por %p105, %p106
      %p108 = scmp.ne.s32.totalorder %s99, %s100
      %p109 = scmp.eq.s32.totalorder %s26, 0
      %p110 = por %p108, %p109
      %p111 = scmp.ne.s32.totalorder %s99, %s100
      %p112 = scmp.eq.s32.totalorder %s27, 1
      %p113 = por %p111, %p112
      %p115 = scmp.ne.s32.totalorder %s100, %s114
      %p116 = scmp.eq.s32.totalorder %s27, 0
      %p117 = por %p115, %p116
      %s119 = sadd.s32 %s118, 1
      %p122 = scmp.eq.s32.totalorder %s21, 1
      %p123 = scmp.ne.s32.totalorder %s118, %s120
      %p124 = scmp.eq.s32.totalorder %s21, 0
      %p125 = por %p123, %p124
      %p126 = scmp.ne.s32.totalorder %s118, %s120
      %p127 = scmp.eq.s32.totalorder %s26, 1
      %p128 = por %p126, %p127
      %p129 = scmp.ne.s32.totalorder %s120, %s121
      %p130 = scmp.eq.s32.totalorder %s26, 0
      %p131 = por %p129, %p130
      %p132 = scmp.ne.s32.totalorder %s120, %s121
      %p133 = scmp.eq.s32.totalorder %s27, 1
      %p134 = por %p132, %p133
      %p136 = scmp.ne.s32.totalorder %s121, %s135
      %p137 = scmp.eq.s32.totalorder %s27, 0
      %p138 = por %p136, %p137
      %s140 = sadd.s32 %s139, 1
      %p143 = scmp.eq.s32.totalorder %s21, 1
      %p144 = scmp.ne.s32.totalorder %s139, %s141
      %p145 = scmp.eq.s32.totalorder %s21, 0
      %p146 = por %p144, %p145
      %p147 = scmp.ne.s32.totalorder %s139, %s141
      %p148 = scmp.eq.s32.totalorder %s26, 1
      %p149 = por %p147, %p148
      %p150 = scmp.ne.s32.totalorder %s141, %s142
      %p151 = scmp.eq.s32.totalorder %s26, 0
      %p152 = por %p150, %p151
      %p153 = scmp.ne.s32.totalorder %s141, %s142
      %p154 = scmp.eq.s32.totalorder %s27, 1
      %p155 = por %p153, %p154
      %p157 = scmp.ne.s32.totalorder %s142, %s156
      %p158 = scmp.eq.s32.totalorder %s27, 0
      %p159 = por %p157, %p158
      %s161 = sadd.s32 %s160, 1
      %p164 = scmp.eq.s32.totalorder %s21, 1
      %p165 = scmp.ne.s32.totalorder %s160, %s162
      %p166 = scmp.eq.s32.totalorder %s21, 0
      %p167 = por %p165, %p166
      %p168 = scmp.ne.s32.totalorder %s160, %s162
      %p169 = scmp.eq.s32.totalorder %s26, 1
      %p170 = por %p168, %p169
      %p171 = scmp.ne.s32.totalorder %s162, %s163
      %p172 = scmp.eq.s32.totalorder %s26, 0
      %p173 = por %p171, %p172
      %p174 = scmp.ne.s32.totalorder %s162, %s163
      %p175 = scmp.eq.s32.totalorder %s27, 1
      %p176 = por %p174, %p175
      %p178 = scmp.ne.s32.totalorder %s163, %s177
      %p179 = scmp.eq.s32.totalorder %s27, 0
      %p180 = por %p178, %p179
      %s182 = sadd.s32 %s181, 1
      %p185 = scmp.eq.s32.totalorder %s21, 1
      %p186 = scmp.ne.s32.totalorder %s181, %s183
      %p187 = scmp.eq.s32.totalorder %s21, 0
      %p188 = por %p186, %p187
      %p189 = scmp.ne.s32.totalorder %s181, %s183
      %p190 = scmp.eq.s32.totalorder %s26, 1
      %p191 = por %p189, %p190
      %p192 = scmp.ne.s32.totalorder %s183, %s184
      %p193 = scmp.eq.s32.totalorder %s26, 0
      %p194 = por %p192, %p193
      %p195 = scmp.ne.s32.totalorder %s183, %s184
      %p196 = scmp.eq.s32.totalorder %s27, 1
      %p197 = por %p195, %p196
      %p199 = scmp.ne.s32.totalorder %s184, %s198
      %p200 = scmp.eq.s32.totalorder %s27, 0
      %p201 = por %p199, %p200
      %s203 = sadd.s32 %s202, 1
      %p206 = scmp.eq.s32.totalorder %s21, 1
      %p207 = scmp.ne.s32.totalorder %s202, %s204
      %p208 = scmp.eq.s32.totalorder %s21, 0
      %p209 = por %p207, %p208
      %p210 = scmp.ne.s32.totalorder %s202, %s204
      %p211 = scmp.eq.s32.totalorder %s26, 1
      %p212 = por %p210, %p211
      %p213 = scmp.ne.s32.totalorder %s204, %s205
      %p214 = scmp.eq.s32.totalorder %s26, 0
      %p215 = por %p213, %p214
      %p216 = scmp.ne.s32.totalorder %s204, %s205
      %p217 = scmp.eq.s32.totalorder %s27, 1
      %p218 = por %p216, %p217
      %p220 = scmp.ne.s32.totalorder %s205, %s219
      %p221 = scmp.eq.s32.totalorder %s27, 0
      %p222 = por %p220, %p221
      %s224 = sadd.s32 %s223, 1
      %p227 = scmp.eq.s32.totalorder %s21, 1
      %p228 = scmp.ne.s32.totalorder %s223, %s225
      %p229 = scmp.eq.s32.totalorder %s21, 0
      %p230 = por %p228, %p229
      %p231 = scmp.ne.s32.totalorder %s223, %s225
      %p232 = scmp.eq.s32.totalorder %s26, 1
      %p233 = por %p231, %p232
      %p234 = scmp.ne.s32.totalorder %s225, %s226
      %p235 = scmp.eq.s32.totalorder %s26, 0
      %p236 = por %p234, %p235
      %p237 = scmp.ne.s32.totalorder %s225, %s226
      %p238 = scmp.eq.s32.totalorder %s27, 1
      %p239 = por %p237, %p238
      %p241 = scmp.ne.s32.totalorder %s226, %s240
      %p242 = scmp.eq.s32.totalorder %s27, 0
      %p243 = por %p241, %p242
      %s245 = sadd.s32 %s244, 1
      %p248 = scmp.eq.s32.totalorder %s21, 1
      %p249 = scmp.ne.s32.totalorder %s244, %s246
      %p250 = scmp.eq.s32.totalorder %s21, 0
      %p251 = por %p249, %p250
      %p252 = scmp.ne.s32.totalorder %s244, %s246
      %p253 = scmp.eq.s32.totalorder %s26, 1
      %p254 = por %p252, %p253
      %p255 = scmp.ne.s32.totalorder %s246, %s247
      %p256 = scmp.eq.s32.totalorder %s26, 0
      %p257 = por %p255, %p256
      %p258 = scmp.ne.s32.totalorder %s246, %s247
      %p259 = scmp.eq.s32.totalorder %s27, 1
      %p260 = por %p258, %p259
      %p262 = scmp.ne.s32.totalorder %s247, %s261
      %p263 = scmp.eq.s32.totalorder %s27, 0
      %p264 = por %p262, %p263
      %s266 = sadd.s32 %s265, 1
      %p269 = scmp.eq.s32.totalorder %s21, 1
      %p270 = scmp.ne.s32.totalorder %s265, %s267
      %p271 = scmp.eq.s32.totalorder %s21, 0
      %p272 = por %p270, %p271
      %p273 = scmp.ne.s32.totalorder %s265, %s267
      %p274 = scmp.eq.s32.totalorder %s26, 1
      %p275 = por %p273, %p274
      %p276 = scmp.ne.s32.totalorder %s267, %s268
      %p277 = scmp.eq.s32.totalorder %s26, 0
      %p278 = por %p276, %p277
      %p279 = scmp.ne.s32.totalorder %s267, %s268
      %p280 = scmp.eq.s32.totalorder %s27, 1
      %p281 = por %p279, %p280
      %p283 = scmp.ne.s32.totalorder %s268, %s282
      %p284 = scmp.eq.s32.totalorder %s27, 0
      %p285 = por %p283, %p284
      %s286 = ssub.s32 %s21, %s28
      %p287 = scmp.eq.s32.totalorder %s286, 0
      %s289 = sadd.s32 %s288, 1
      %s290 = scalar_select %p287, %s288, %s289
      %p293 = pneg %p287
      %p294 = scmp.eq.s32.totalorder %s21, 1
      %p295 = por %p293, %p294
      %p296 = scmp.ne.s32.totalorder %s288, %s291
      %p297 = scmp.eq.s32.totalorder %s21, 0
      %p298 = por %p296, %p297
      %p299 = scmp.ne.s32.totalorder %s288, %s291
      %p300 = scmp.eq.s32.totalorder %s26, 1
      %p301 = por %p299, %p300
      %p302 = scmp.ne.s32.totalorder %s291, %s292
      %p303 = scmp.eq.s32.totalorder %s26, 0
      %p304 = por %p302, %p303
      %p305 = scmp.ne.s32.totalorder %s291, %s292
      %p306 = scmp.eq.s32.totalorder %s27, 1
      %p307 = por %p305, %p306
      %p309 = scmp.ne.s32.totalorder %s292, %s308
      %p310 = scmp.eq.s32.totalorder %s27, 0
      %p311 = por %p309, %p310
      %p312 = scmp.le.s32.totalorder 1, %s21
      %p313 = scmp.lt.s32.totalorder %s21, 3
      %p314 = pnand %p312, %p313
      %p315 = pneg %p314
      // Predicated region
      $region9: #{tpu_custom_call.1} parent=5 // pred_check
        _
      $region10: #{tpu_custom_call.1} parent=5 // pred_check_branch
        %317 = sbr.rel (%p314) target = $region12
      $region11: #{tpu_custom_call.1} parent=5 // pred_region
        %s318 = ssub.s32 %s21, 1
        // Predicated region
        $region13: #{tpu_custom_call.1} parent=11 // pred_check
          %p319 = pneg %p68
        $region14: #{tpu_custom_call.1} parent=11 // pred_check_branch
          %321 = sbr.rel (%p319) target = $region16
        $region15: #{tpu_custom_call.1} parent=11 // pred_region
          _
        $region16: #{tpu_custom_call.1} parent=11 // pred_fallthru
          _
        // Predicated region
        $region17: #{tpu_custom_call.1} parent=11 // pred_check
          %p322 = pneg %p89
        $region18: #{tpu_custom_call.1} parent=11 // pred_check_branch
          %324 = sbr.rel (%p322) target = $region20
        $region19: #{tpu_custom_call.1} parent=11 // pred_region
          _
        $region20: #{tpu_custom_call.1} parent=11 // pred_fallthru
          _
        // Predicated region
        $region21: #{tpu_custom_call.1} parent=11 // pred_check
          %p325 = pneg %p110
        $region22: #{tpu_custom_call.1} parent=11 // pred_check_branch
          %327 = sbr.rel (%p325) target = $region24
        $region23: #{tpu_custom_call.1} parent=11 // pred_region
          _
        $region24: #{tpu_custom_call.1} parent=11 // pred_fallthru
          _
        // Predicated region
        $region25: #{tpu_custom_call.1} parent=11 // pred_check
          %p328 = pneg %p131
        $region26: #{tpu_custom_call.1} parent=11 // pred_check_branch
          %330 = sbr.rel (%p328) target = $region28
        $region27: #{tpu_custom_call.1} parent=11 // pred_region
          _
        $region28: #{tpu_custom_call.1} parent=11 // pred_fallthru
          _
        // Predicated region
        $region29: #{tpu_custom_call.1} parent=11 // pred_check
          %p331 = pneg %p152
        $region30: #{tpu_custom_call.1} parent=11 // pred_check_branch
          %333 = sbr.rel (%p331) target = $region32
        $region31: #{tpu_custom_call.1} parent=11 // pred_region
          _
        $region32: #{tpu_custom_call.1} parent=11 // pred_fallthru
          _
        // Predicated region
        $region33: #{tpu_custom_call.1} parent=11 // pred_check
          %p334 = pneg %p173
        $region34: #{tpu_custom_call.1} parent=11 // pred_check_branch
          %336 = sbr.rel (%p334) target = $region36
        $region35: #{tpu_custom_call.1} parent=11 // pred_region
          _
        $region36: #{tpu_custom_call.1} parent=11 // pred_fallthru
          _
        // Predicated region
        $region37: #{tpu_custom_call.1} parent=11 // pred_check
          %p337 = pneg %p194
        $region38: #{tpu_custom_call.1} parent=11 // pred_check_branch
          %339 = sbr.rel (%p337) target = $region40
        $region39: #{tpu_custom_call.1} parent=11 // pred_region
          _
        $region40: #{tpu_custom_call.1} parent=11 // pred_fallthru
          _
        // Predicated region
        $region41: #{tpu_custom_call.1} parent=11 // pred_check
          %p340 = pneg %p215
        $region42: #{tpu_custom_call.1} parent=11 // pred_check_branch
          %342 = sbr.rel (%p340) target = $region44
        $region43: #{tpu_custom_call.1} parent=11 // pred_region
          _
        $region44: #{tpu_custom_call.1} parent=11 // pred_fallthru
          _
        // Predicated region
        $region45: #{tpu_custom_call.1} parent=11 // pred_check
          %p343 = pneg %p236
        $region46: #{tpu_custom_call.1} parent=11 // pred_check_branch
          %345 = sbr.rel (%p343) target = $region48
        $region47: #{tpu_custom_call.1} parent=11 // pred_region
          _
        $region48: #{tpu_custom_call.1} parent=11 // pred_fallthru
          _
        // Predicated region
        $region49: #{tpu_custom_call.1} parent=11 // pred_check
          %p346 = pneg %p257
        $region50: #{tpu_custom_call.1} parent=11 // pred_check_branch
          %348 = sbr.rel (%p346) target = $region52
        $region51: #{tpu_custom_call.1} parent=11 // pred_region
          _
        $region52: #{tpu_custom_call.1} parent=11 // pred_fallthru
          _
        // Predicated region
        $region53: #{tpu_custom_call.1} parent=11 // pred_check
          %p349 = pneg %p278
        $region54: #{tpu_custom_call.1} parent=11 // pred_check_branch
          %351 = sbr.rel (%p349) target = $region56
        $region55: #{tpu_custom_call.1} parent=11 // pred_region
          _
        $region56: #{tpu_custom_call.1} parent=11 // pred_fallthru
          _
      $region12: #{tpu_custom_call.1} parent=5 // pred_fallthru
        _
      %p352 = scmp.lt.s32.totalorder %s21, 2
      // Predicated region
      $region57: #{tpu_custom_call.1} parent=5 // pred_check
        %p353 = pneg %p352
      $region58: #{tpu_custom_call.1} parent=5 // pred_check_branch
        %355 = sbr.rel (%p353) target = $region60
      $region59: #{tpu_custom_call.1} parent=5 // pred_region
        // Predicated region
        $region61: #{tpu_custom_call.1} parent=59 // pred_check
          %p356 = pneg %p41
        $region62: #{tpu_custom_call.1} parent=59 // pred_check_branch
          %358 = sbr.rel (%p356) target = $region64
        $region63: #{tpu_custom_call.1} parent=59 // pred_region
          %p359 = scmp.lt.s32.totalorder %s21, 1
          %s360 = scalar_select %p359, %s21, 1
          %s361 = smul.addr %s360, 8
          %s362 = scalar_lea.vmem %s0, %s361
        $region64: #{tpu_custom_call.1} parent=59 // pred_fallthru
          _
      $region60: #{tpu_custom_call.1} parent=5 // pred_fallthru
        _
      %p363 = scmp.le.s32.totalorder 1, %s21
      %p364 = scmp.lt.s32.totalorder %s21, 3
      %p365 = pnand %p363, %p364
      %p366 = pneg %p365
      // Predicated region
      $region65: #{tpu_custom_call.1} parent=5 // pred_check
        _
      $region66: #{tpu_custom_call.1} parent=5 // pred_check_branch
        %368 = sbr.rel (%p365) target = $region68
      $region67: #{tpu_custom_call.1} parent=5 // pred_region
        %s369 = ssub.s32 %s21, 1
        %p370 = scmp.lt.s32.totalorder %s26, 1
        %s371 = scalar_select %p370, %s26, 1
        %s372 = smul.addr %s371, 8
        %s373 = scalar_lea.vmem %s0, %s372
        %p374 = pneg %p47
        %p375 = pneg %p44
        %p376 = pneg %p68
        %p377 = pneg %p65
        %p378 = pneg %p89
        %p379 = pneg %p86
        %p380 = pneg %p110
        %p381 = pneg %p107
        %p382 = pneg %p131
        %p383 = pneg %p128
        %p384 = pneg %p152
        %p385 = pneg %p149
        %p386 = pneg %p173
        %p387 = pneg %p170
        %p388 = pneg %p194
        %p389 = pneg %p191
        %p390 = pneg %p215
        %p391 = pneg %p212
        %p392 = pneg %p236
        %p393 = pneg %p233
        %p394 = pneg %p257
        %p395 = pneg %p254
        %p396 = pneg %p278
        %p397 = pneg %p275
        %p398 = pneg %p304
        %p399 = pneg %p301
        %s400 = sand.u32 %s291, 1
        %s401 = scalar_lea.sflag [#allocation3], %s400
        %s402 = sand.u32 %s291, 1
        %s403 = smul.addr %s402, 8
        %s404 = scalar_lea.vmem [#allocation2], %s403
        %p405 = scmp.lt.s32.totalorder %s26, 1
        %s406 = scalar_select %p405, %s26, 1
        %s407 = smul.addr %s406, 8
        %s408 = scalar_lea.vmem %s0, %s407
        %v410 = vld [vmem:[%s408] sm:$0xff]
        %v411 = vld [vmem:[%s1] sm:$0x1]
        %v412 = vld [vmem:[%s2] sm:$0x1]
        %vm413 = vcmask 261120
        %v414 = vsel %vm413, %v410, 0.0
        %415 = vadd.xlane.f32.xlu0 %v414
        %v416 = vpop.xlane.xlu0 %415
        %v417 = vrcp.pop 32.0
        %v418 = vmul.f32 %v416, %v417
        %v419 = vsub.f32 %v410, %v418
        %v420 = vmul.f32 %v419, %v419
        %v421 = vsel %vm413, %v420, 0.0
        %422 = vadd.xlane.f32.xlu0 %v421
        %v423 = vpop.xlane.xlu0 %422
        %v424 = vmul.f32 %v423, %v417
        %v425 = vadd.f32 %v424, 1e-05
        %v426 = vrsqrt.pop %v425
        %v427 = vmul.f32 %v419, %v426
        %v429 = vlaneseq
        %v430 = vshrl.u32 %v429, 7
        %v431 = vsub.s32 0, %v430
        %v432 = vrot.slane %v411, %v431
        %v434 = vmul.f32 %v427, %v432
        %v436 = vlaneseq
        %v437 = vshrl.u32 %v436, 7
        %v438 = vsub.s32 0, %v437
        %v439 = vrot.slane %v412, %v438
        %v441 = vadd.f32 %v434, %v439
        %v442 = vpack.c.bf16 %v441, %v441
        %v443 = vld [vmem:[%s3] sm:$0xf]
        %v444 = vld [vmem:[%s3 + $0x4] sm:$0xf]
        %v445 = vld [vmem:[%s3 + $0x8] sm:$0xf]
        %v446 = vld [vmem:[%s3 + $0xc] sm:$0xf]
        %v451 = vunpack.c.l.b16 %v443
        %v452 = vunpack.c.l.b16 %v444
        %v453 = vunpack.c.l.b16 %v445
        %v454 = vunpack.c.l.b16 %v446
        %v455 = vpack.c.b16 %v452, %v451
        %v456 = vpack.c.b16 %v454, %v453
        %v460 = vsel %vm413, %v442, 0
        %462 = vmatprep.subr.bf16.mxu0 0
        %463 = vmatpush1.bf16.msra.mxu0 0
        %464 = vmatprep.subr.bf16.mxu0 0
        %465 = vmatpush1.bf16.msra.mxu0 0
        %466 = vmatprep.subr.bf16.mxu0 0
        %467 = vmatpush1.bf16.msra.mxu0 0
        %468 = vmatprep.subr.bf16.mxu0 0
        %469 = vmatpush1.bf16.msra.mxu0 0
        %470 = vmatprep.subr.bf16.mxu0 0
        %471 = vmatpush1.bf16.msra.mxu0 0
        %472 = vmatprep.subr.bf16.mxu0 0
        %473 = vmatpush1.bf16.msra.mxu0 0
        %474 = vmatprep.subr.bf16.mxu0 0
        %475 = vmatpush1.bf16.msra.mxu0 %v456
        %476 = vmatprep.subr.bf16.mxu0 0
        %477 = vmatpush1.bf16.msra.mxu0 %v455
        %478 = vmatprep.subr.bf16.mxu0 0
        %479 = vmatpush2.bf16.msra.mxu0 0
        %480 = vmatprep.subr.bf16.mxu0 0
        %481 = vmatpush2.bf16.msra.mxu0 0
        %482 = vmatprep.subr.bf16.mxu0 0
        %483 = vmatpush2.bf16.msra.mxu0 0
        %484 = vmatprep.subr.bf16.mxu0 0
        %485 = vmatpush2.bf16.msra.mxu0 0
        %486 = vmatprep.subr.bf16.mxu0 0
        %487 = vmatpush2.bf16.msra.mxu0 0
        %488 = vmatprep.subr.bf16.mxu0 0
        %489 = vmatpush2.bf16.msra.mxu0 0
        %490 = vmatprep.subr.bf16.mxu0 0
        %491 = vmatpush2.bf16.msra.mxu0 0
        %492 = vmatprep.subr.bf16.mxu0 0
        %493 = vmatpush2.bf16.msra.mxu0 0
        %494 = vmatprep.mubr.bf16.mxu0 0
        %495 = vmatmul.mubr.bf16.gmra.mxu0 %v460
        %v496 = vpop.f32.mrf.mxu0
        %v497 = vadd.f32 0.0, %v496
        %v498 = vpop.f32.mrf.mxu0
        %v499 = vpop.f32.mrf.mxu0
        %v500 = vpop.f32.mrf.mxu0
        %501 = vdwg.mxu0
        %v502 = vpack.c.bf16 %v497, %v497
        %504 = vrot.lane.b32.xlu0 %v502, 120
        %v505 = vpop.permute.xlu0 %504
        %506 = vrot.lane.b32.xlu0 %v502, 112
        %v507 = vpop.permute.xlu0 %506
        %508 = vrot.lane.b32.xlu0 %v502, 104
        %v509 = vpop.permute.xlu0 %508
        %v510 = vlaneseq
        %v511 = vshrl.u32 %v510, 7
        %v512 = vlaneseq
        %v513 = vand.u32 %v512, 127
        %vm514 = vcmp.ge.s32.totalorder %v511, %v513
        %515 = vrot.lane.b32.xlu0 %v502, 96
        %v516 = vpop.permute.xlu0 %515
        %vm517 = vcmask 64512
        %v519 = vsel %vm517, %v502, 0
        %v522 = vsel %vm517, %v516, 0
        %524 = vmatprep.subr.bf16.mxu0 0
        %525 = vmatpush1.bf16.xpose.msra.mxu0 0
        %526 = vmatprep.subr.bf16.mxu0 0
        %527 = vmatpush1.bf16.xpose.msra.mxu0 0
        %528 = vmatprep.subr.bf16.mxu0 0
        %529 = vmatpush1.bf16.xpose.msra.mxu0 0
        %530 = vmatprep.subr.bf16.mxu0 0
        %531 = vmatpush1.bf16.xpose.msra.mxu0 0
        %532 = vmatprep.subr.bf16.mxu0 0
        %533 = vmatpush1.bf16.xpose.msra.mxu0 0
        %534 = vmatprep.subr.bf16.mxu0 0
        %535 = vmatpush1.bf16.xpose.msra.mxu0 0
        %536 = vmatprep.subr.bf16.mxu0 0
        %537 = vmatpush1.bf16.xpose.msra.mxu0 0
        %538 = vmatprep.subr.bf16.mxu0 0
        %539 = vmatpush1.bf16.xpose.msra.mxu0 %v522
        %540 = vmatprep.subr.bf16.mxu0 0
        %541 = vmatpush2.bf16.xpose.msra.mxu0 0
        %542 = vmatprep.subr.bf16.mxu0 0
        %543 = vmatpush2.bf16.xpose.msra.mxu0 0
        %544 = vmatprep.subr.bf16.mxu0 0
        %545 = vmatpush2.bf16.xpose.msra.mxu0 0
        %546 = vmatprep.subr.bf16.mxu0 0
        %547 = vmatpush2.bf16.xpose.msra.mxu0 0
        %548 = vmatprep.subr.bf16.mxu0 0
        %549 = vmatpush2.bf16.xpose.msra.mxu0 0
        %550 = vmatprep.subr.bf16.mxu0 0
        %551 = vmatpush2.bf16.xpose.msra.mxu0 0
        %552 = vmatprep.subr.bf16.mxu0 0
        %553 = vmatpush2.bf16.xpose.msra.mxu0 0
        %554 = vmatprep.subr.bf16.mxu0 0
        %555 = vmatpush2.bf16.xpose.msra.mxu0 0
        %556 = vmatprep.mubr.bf16.mxu0 0
        %557 = vmatmul.mubr.bf16.gmra.mxu0 %v519
        %v558 = vpop.f32.mrf.mxu0
        %v559 = vadd.f32 0.0, %v558
        %v560 = vpop.f32.mrf.mxu0
        %v561 = vpop.f32.mrf.mxu0
        %v562 = vpop.f32.mrf.mxu0
        %563 = vdwg.mxu0
        %564 = vrot.lane.b32.xlu0 %v505, 96
        %v565 = vpop.permute.xlu0 %564
        %v567 = vsel %vm517, %v505, 0
        %v570 = vsel %vm517, %v565, 0
        %572 = vmatprep.subr.bf16.mxu0 0
        %573 = vmatpush1.bf16.xpose.msra.mxu0 0
        %574 = vmatprep.subr.bf16.mxu0 0
        %575 = vmatpush1.bf16.xpose.msra.mxu0 0
        %576 = vmatprep.subr.bf16.mxu0 0
        %577 = vmatpush1.bf16.xpose.msra.mxu0 0
        %578 = vmatprep.subr.bf16.mxu0 0
        %579 = vmatpush1.bf16.xpose.msra.mxu0 0
        %580 = vmatprep.subr.bf16.mxu0 0
        %581 = vmatpush1.bf16.xpose.msra.mxu0 0
        %582 = vmatprep.subr.bf16.mxu0 0
        %583 = vmatpush1.bf16.xpose.msra.mxu0 0
        %584 = vmatprep.subr.bf16.mxu0 0
        %585 = vmatpush1.bf16.xpose.msra.mxu0 0
        %586 = vmatprep.subr.bf16.mxu0 0
        %587 = vmatpush1.bf16.xpose.msra.mxu0 %v570
        %588 = vmatprep.subr.bf16.mxu0 0
        %589 = vmatpush2.bf16.xpose.msra.mxu0 0
        %590 = vmatprep.subr.bf16.mxu0 0
        %591 = vmatpush2.bf16.xpose.msra.mxu0 0
        %592 = vmatprep.subr.bf16.mxu0 0
        %593 = vmatpush2.bf16.xpose.msra.mxu0 0
        %594 = vmatprep.subr.bf16.mxu0 0
        %595 = vmatpush2.bf16.xpose.msra.mxu0 0
        %596 = vmatprep.subr.bf16.mxu0 0
        %597 = vmatpush2.bf16.xpose.msra.mxu0 0
        %598 = vmatprep.subr.bf16.mxu0 0
        %599 = vmatpush2.bf16.xpose.msra.mxu0 0
        %600 = vmatprep.subr.bf16.mxu0 0
        %601 = vmatpush2.bf16.xpose.msra.mxu0 0
        %602 = vmatprep.subr.bf16.mxu0 0
        %603 = vmatpush2.bf16.xpose.msra.mxu0 0
        %604 = vmatprep.mubr.bf16.mxu0 0
        %605 = vmatmul.mubr.bf16.gmra.mxu0 %v567
        %v606 = vpop.f32.mrf.mxu0
        %v607 = vadd.f32 0.0, %v606
        %v608 = vpop.f32.mrf.mxu0
        %v609 = vpop.f32.mrf.mxu0
        %v610 = vpop.f32.mrf.mxu0
        %611 = vdwg.mxu0
        %612 = vrot.lane.b32.xlu0 %v507, 96
        %v613 = vpop.permute.xlu0 %612
        %v615 = vsel %vm517, %v507, 0
        %v618 = vsel %vm517, %v613, 0
        %620 = vmatprep.subr.bf16.mxu0 0
        %621 = vmatpush1.bf16.xpose.msra.mxu0 0
        %622 = vmatprep.subr.bf16.mxu0 0
        %623 = vmatpush1.bf16.xpose.msra.mxu0 0
        %624 = vmatprep.subr.bf16.mxu0 0
        %625 = vmatpush1.bf16.xpose.msra.mxu0 0
        %626 = vmatprep.subr.bf16.mxu0 0
        %627 = vmatpush1.bf16.xpose.msra.mxu0 0
        %628 = vmatprep.subr.bf16.mxu0 0
        %629 = vmatpush1.bf16.xpose.msra.mxu0 0
        %630 = vmatprep.subr.bf16.mxu0 0
        %631 = vmatpush1.bf16.xpose.msra.mxu0 0
        %632 = vmatprep.subr.bf16.mxu0 0
        %633 = vmatpush1.bf16.xpose.msra.mxu0 0
        %634 = vmatprep.subr.bf16.mxu0 0
        %635 = vmatpush1.bf16.xpose.msra.mxu0 %v618
        %636 = vmatprep.subr.bf16.mxu0 0
        %637 = vmatpush2.bf16.xpose.msra.mxu0 0
        %638 = vmatprep.subr.bf16.mxu0 0
        %639 = vmatpush2.bf16.xpose.msra.mxu0 0
        %640 = vmatprep.subr.bf16.mxu0 0
        %641 = vmatpush2.bf16.xpose.msra.mxu0 0
        %642 = vmatprep.subr.bf16.mxu0 0
        %643 = vmatpush2.bf16.xpose.msra.mxu0 0
        %644 = vmatprep.subr.bf16.mxu0 0
        %645 = vmatpush2.bf16.xpose.msra.mxu0 0
        %646 = vmatprep.subr.bf16.mxu0 0
        %647 = vmatpush2.bf16.xpose.msra.mxu0 0
        %648 = vmatprep.subr.bf16.mxu0 0
        %649 = vmatpush2.bf16.xpose.msra.mxu0 0
        %650 = vmatprep.subr.bf16.mxu0 0
        %651 = vmatpush2.bf16.xpose.msra.mxu0 0
        %652 = vmatprep.mubr.bf16.mxu0 0
        %653 = vmatmul.mubr.bf16.gmra.mxu0 %v615
        %v654 = vpop.f32.mrf.mxu0
        %v655 = vadd.f32 0.0, %v654
        %v656 = vpop.f32.mrf.mxu0
        %v657 = vpop.f32.mrf.mxu0
        %v658 = vpop.f32.mrf.mxu0
        %659 = vdwg.mxu0
        %660 = vrot.lane.b32.xlu0 %v509, 96
        %v661 = vpop.permute.xlu0 %660
        %v663 = vsel %vm517, %v509, 0
        %v666 = vsel %vm517, %v661, 0
        %668 = vmatprep.subr.bf16.mxu0 0
        %669 = vmatpush1.bf16.xpose.msra.mxu0 0
        %670 = vmatprep.subr.bf16.mxu0 0
        %671 = vmatpush1.bf16.xpose.msra.mxu0 0
        %672 = vmatprep.subr.bf16.mxu0 0
        %673 = vmatpush1.bf16.xpose.msra.mxu0 0
        %674 = vmatprep.subr.bf16.mxu0 0
        %675 = vmatpush1.bf16.xpose.msra.mxu0 0
        %676 = vmatprep.subr.bf16.mxu0 0
        %677 = vmatpush1.bf16.xpose.msra.mxu0 0
        %678 = vmatprep.subr.bf16.mxu0 0
        %679 = vmatpush1.bf16.xpose.msra.mxu0 0
        %680 = vmatprep.subr.bf16.mxu0 0
        %681 = vmatpush1.bf16.xpose.msra.mxu0 0
        %682 = vmatprep.subr.bf16.mxu0 0
        %683 = vmatpush1.bf16.xpose.msra.mxu0 %v666
        %684 = vmatprep.subr.bf16.mxu0 0
        %685 = vmatpush2.bf16.xpose.msra.mxu0 0
        %686 = vmatprep.subr.bf16.mxu0 0
        %687 = vmatpush2.bf16.xpose.msra.mxu0 0
        %688 = vmatprep.subr.bf16.mxu0 0
        %689 = vmatpush2.bf16.xpose.msra.mxu0 0
        %690 = vmatprep.subr.bf16.mxu0 0
        %691 = vmatpush2.bf16.xpose.msra.mxu0 0
        %692 = vmatprep.subr.bf16.mxu0 0
        %693 = vmatpush2.bf16.xpose.msra.mxu0 0
        %694 = vmatprep.subr.bf16.mxu0 0
        %695 = vmatpush2.bf16.xpose.msra.mxu0 0
        %696 = vmatprep.subr.bf16.mxu0 0
        %697 = vmatpush2.bf16.xpose.msra.mxu0 0
        %698 = vmatprep.subr.bf16.mxu0 0
        %699 = vmatpush2.bf16.xpose.msra.mxu0 0
        %700 = vmatprep.mubr.bf16.mxu0 0
        %701 = vmatmul.mubr.bf16.gmra.mxu0 %v663
        %v702 = vpop.f32.mrf.mxu0
        %v703 = vadd.f32 0.0, %v702
        %v704 = vpop.f32.mrf.mxu0
        %v705 = vpop.f32.mrf.mxu0
        %v706 = vpop.f32.mrf.mxu0
        %707 = vdwg.mxu0
        %v708 = vmul.f32 %v559, 0.35355338
        %v709 = vmul.f32 %v607, 0.35355338
        %v710 = vmul.f32 %v655, 0.35355338
        %v711 = vmul.f32 %v703, 0.35355338
        %v712 = vsel %vm514, 1, 0
        %vm713 = vcmp.eq.s32.totalorder %v712, 1
        %v714 = vsel %vm713, %v708, -inf
        %v715 = vsel %vm713, %v709, -inf
        %v716 = vsel %vm713, %v710, -inf
        %v717 = vsel %vm713, %v711, -inf
        %v718 = vsel %vm517, %v714, -inf
        %719 = vmax.xlane.f32.xlu0 %v718
        %v720 = vpop.xlane.xlu0 %719
        %v721 = vsel %vm517, %v715, -inf
        %722 = vmax.xlane.f32.xlu0 %v721
        %v723 = vpop.xlane.xlu0 %722
        %v724 = vsel %vm517, %v716, -inf
        %725 = vmax.xlane.f32.xlu0 %v724
        %v726 = vpop.xlane.xlu0 %725
        %v727 = vsel %vm517, %v717, -inf
        %728 = vmax.xlane.f32.xlu0 %v727
        %v729 = vpop.xlane.xlu0 %728
        %v730 = vsub.f32 %v714, %v720
        %v731 = vsub.f32 %v715, %v723
        %v732 = vsub.f32 %v716, %v726
        %v733 = vsub.f32 %v717, %v729
        %v734 = vmul.f32 %v730, 1.442695
        %v735 = vpow.pop %v734
        %v736 = vmul.f32 %v731, 1.442695
        %v737 = vpow.pop %v736
        %v738 = vmul.f32 %v732, 1.442695
        %v739 = vpow.pop %v738
        %v740 = vmul.f32 %v733, 1.442695
        %v741 = vpow.pop %v740
        %v742 = vsel %vm517, %v735, 0.0
        %743 = vadd.xlane.f32.xlu0 %v742
        %v744 = vpop.xlane.xlu0 %743
        %v745 = vsel %vm517, %v737, 0.0
        %746 = vadd.xlane.f32.xlu0 %v745
        %v747 = vpop.xlane.xlu0 %746
        %v748 = vsel %vm517, %v739, 0.0
        %749 = vadd.xlane.f32.xlu0 %v748
        %v750 = vpop.xlane.xlu0 %749
        %v751 = vsel %vm517, %v741, 0.0
        %752 = vadd.xlane.f32.xlu0 %v751
        %v753 = vpop.xlane.xlu0 %752
        %v754 = vrcp.pop %v744
        %v755 = vrcp.pop %v747
        %v756 = vrcp.pop %v750
        %v757 = vrcp.pop %v753
        %v758 = vmul.f32 %v735, %v754
        %v759 = vmul.f32 %v737, %v755
        %v760 = vmul.f32 %v739, %v756
        %v761 = vmul.f32 %v741, %v757
        %v762 = vpack.c.bf16 %v758, %v758
        %v763 = vpack.c.bf16 %v759, %v759
        %v764 = vpack.c.bf16 %v760, %v760
        %v765 = vpack.c.bf16 %v761, %v761
        %766 = vrot.lane.b32.xlu0 %v502, 64
        %v767 = vpop.permute.xlu0 %766
        %v769 = vsel %vm517, %v762, 0
        %vm771 = vcmask 1043456
        %v773 = vsel %vm771, %v767, 0
        %775 = vmatprep.subr.bf16.mxu0 0
        %776 = vmatpush1.bf16.msra.mxu0 0
        %777 = vmatprep.subr.bf16.mxu0 0
        %778 = vmatpush1.bf16.msra.mxu0 0
        %779 = vmatprep.subr.bf16.mxu0 0
        %780 = vmatpush1.bf16.msra.mxu0 0
        %781 = vmatprep.subr.bf16.mxu0 0
        %782 = vmatpush1.bf16.msra.mxu0 0
        %783 = vmatprep.subr.bf16.mxu0 0
        %784 = vmatpush1.bf16.msra.mxu0 0
        %785 = vmatprep.subr.bf16.mxu0 0
        %786 = vmatpush1.bf16.msra.mxu0 0
        %787 = vmatprep.subr.bf16.mxu0 0
        %788 = vmatpush1.bf16.msra.mxu0 0
        %789 = vmatprep.subr.bf16.mxu0 0
        %790 = vmatpush1.bf16.msra.mxu0 %v773
        %791 = vmatprep.subr.bf16.mxu0 0
        %792 = vmatpush2.bf16.msra.mxu0 0
        %793 = vmatprep.subr.bf16.mxu0 0
        %794 = vmatpush2.bf16.msra.mxu0 0
        %795 = vmatprep.subr.bf16.mxu0 0
        %796 = vmatpush2.bf16.msra.mxu0 0
        %797 = vmatprep.subr.bf16.mxu0 0
        %798 = vmatpush2.bf16.msra.mxu0 0
        %799 = vmatprep.subr.bf16.mxu0 0
        %800 = vmatpush2.bf16.msra.mxu0 0
        %801 = vmatprep.subr.bf16.mxu0 0
        %802 = vmatpush2.bf16.msra.mxu0 0
        %803 = vmatprep.subr.bf16.mxu0 0
        %804 = vmatpush2.bf16.msra.mxu0 0
        %805 = vmatprep.subr.bf16.mxu0 0
        %806 = vmatpush2.bf16.msra.mxu0 0
        %807 = vmatprep.mubr.bf16.mxu0 0
        %808 = vmatmul.mubr.bf16.gmra.mxu0 %v769
        %v809 = vpop.f32.mrf.mxu0
        %v810 = vadd.f32 0.0, %v809
        %v811 = vpop.f32.mrf.mxu0
        %v812 = vpop.f32.mrf.mxu0
        %v813 = vpop.f32.mrf.mxu0
        %814 = vdwg.mxu0
        %815 = vrot.lane.b32.xlu0 %v505, 64
        %v816 = vpop.permute.xlu0 %815
        %v818 = vsel %vm517, %v763, 0
        %v821 = vsel %vm771, %v816, 0
        %823 = vmatprep.subr.bf16.mxu0 0
        %824 = vmatpush1.bf16.msra.mxu0 0
        %825 = vmatprep.subr.bf16.mxu0 0
        %826 = vmatpush1.bf16.msra.mxu0 0
        %827 = vmatprep.subr.bf16.mxu0 0
        %828 = vmatpush1.bf16.msra.mxu0 0
        %829 = vmatprep.subr.bf16.mxu0 0
        %830 = vmatpush1.bf16.msra.mxu0 0
        %831 = vmatprep.subr.bf16.mxu0 0
        %832 = vmatpush1.bf16.msra.mxu0 0
        %833 = vmatprep.subr.bf16.mxu0 0
        %834 = vmatpush1.bf16.msra.mxu0 0
        %835 = vmatprep.subr.bf16.mxu0 0
        %836 = vmatpush1.bf16.msra.mxu0 0
        %837 = vmatprep.subr.bf16.mxu0 0
        %838 = vmatpush1.bf16.msra.mxu0 %v821
        %839 = vmatprep.subr.bf16.mxu0 0
        %840 = vmatpush2.bf16.msra.mxu0 0
        %841 = vmatprep.subr.bf16.mxu0 0
        %842 = vmatpush2.bf16.msra.mxu0 0
        %843 = vmatprep.subr.bf16.mxu0 0
        %844 = vmatpush2.bf16.msra.mxu0 0
        %845 = vmatprep.subr.bf16.mxu0 0
        %846 = vmatpush2.bf16.msra.mxu0 0
        %847 = vmatprep.subr.bf16.mxu0 0
        %848 = vmatpush2.bf16.msra.mxu0 0
        %849 = vmatprep.subr.bf16.mxu0 0
        %850 = vmatpush2.bf16.msra.mxu0 0
        %851 = vmatprep.subr.bf16.mxu0 0
        %852 = vmatpush2.bf16.msra.mxu0 0
        %853 = vmatprep.subr.bf16.mxu0 0
        %854 = vmatpush2.bf16.msra.mxu0 0
        %855 = vmatprep.mubr.bf16.mxu0 0
        %856 = vmatmul.mubr.bf16.gmra.mxu0 %v818
        %v857 = vpop.f32.mrf.mxu0
        %v858 = vadd.f32 0.0, %v857
        %v859 = vpop.f32.mrf.mxu0
        %v860 = vpop.f32.mrf.mxu0
        %v861 = vpop.f32.mrf.mxu0
        %862 = vdwg.mxu0
        %863 = vrot.lane.b32.xlu0 %v507, 64
        %v864 = vpop.permute.xlu0 %863
        %v866 = vsel %vm517, %v764, 0
        %v869 = vsel %vm771, %v864, 0
        %871 = vmatprep.subr.bf16.mxu0 0
        %872 = vmatpush1.bf16.msra.mxu0 0
        %873 = vmatprep.subr.bf16.mxu0 0
        %874 = vmatpush1.bf16.msra.mxu0 0
        %875 = vmatprep.subr.bf16.mxu0 0
        %876 = vmatpush1.bf16.msra.mxu0 0
        %877 = vmatprep.subr.bf16.mxu0 0
        %878 = vmatpush1.bf16.msra.mxu0 0
        %879 = vmatprep.subr.bf16.mxu0 0
        %880 = vmatpush1.bf16.msra.mxu0 0
        %881 = vmatprep.subr.bf16.mxu0 0
        %882 = vmatpush1.bf16.msra.mxu0 0
        %883 = vmatprep.subr.bf16.mxu0 0
        %884 = vmatpush1.bf16.msra.mxu0 0
        %885 = vmatprep.subr.bf16.mxu0 0
        %886 = vmatpush1.bf16.msra.mxu0 %v869
        %887 = vmatprep.subr.bf16.mxu0 0
        %888 = vmatpush2.bf16.msra.mxu0 0
        %889 = vmatprep.subr.bf16.mxu0 0
        %890 = vmatpush2.bf16.msra.mxu0 0
        %891 = vmatprep.subr.bf16.mxu0 0
        %892 = vmatpush2.bf16.msra.mxu0 0
        %893 = vmatprep.subr.bf16.mxu0 0
        %894 = vmatpush2.bf16.msra.mxu0 0
        %895 = vmatprep.subr.bf16.mxu0 0
        %896 = vmatpush2.bf16.msra.mxu0 0
        %897 = vmatprep.subr.bf16.mxu0 0
        %898 = vmatpush2.bf16.msra.mxu0 0
        %899 = vmatprep.subr.bf16.mxu0 0
        %900 = vmatpush2.bf16.msra.mxu0 0
        %901 = vmatprep.subr.bf16.mxu0 0
        %902 = vmatpush2.bf16.msra.mxu0 0
        %903 = vmatprep.mubr.bf16.mxu0 0
        %904 = vmatmul.mubr.bf16.gmra.mxu0 %v866
        %v905 = vpop.f32.mrf.mxu0
        %v906 = vadd.f32 0.0, %v905
        %v907 = vpop.f32.mrf.mxu0
        %v908 = vpop.f32.mrf.mxu0
        %v909 = vpop.f32.mrf.mxu0
        %910 = vdwg.mxu0
        %911 = vrot.lane.b32.xlu0 %v509, 64
        %v912 = vpop.permute.xlu0 %911
        %v914 = vsel %vm517, %v765, 0
        %v917 = vsel %vm771, %v912, 0
        %919 = vmatprep.subr.bf16.mxu0 0
        %920 = vmatpush1.bf16.msra.mxu0 0
        %921 = vmatprep.subr.bf16.mxu0 0
        %922 = vmatpush1.bf16.msra.mxu0 0
        %923 = vmatprep.subr.bf16.mxu0 0
        %924 = vmatpush1.bf16.msra.mxu0 0
        %925 = vmatprep.subr.bf16.mxu0 0
        %926 = vmatpush1.bf16.msra.mxu0 0
        %927 = vmatprep.subr.bf16.mxu0 0
        %928 = vmatpush1.bf16.msra.mxu0 0
        %929 = vmatprep.subr.bf16.mxu0 0
        %930 = vmatpush1.bf16.msra.mxu0 0
        %931 = vmatprep.subr.bf16.mxu0 0
        %932 = vmatpush1.bf16.msra.mxu0 0
        %933 = vmatprep.subr.bf16.mxu0 0
        %934 = vmatpush1.bf16.msra.mxu0 %v917
        %935 = vmatprep.subr.bf16.mxu0 0
        %936 = vmatpush2.bf16.msra.mxu0 0
        %937 = vmatprep.subr.bf16.mxu0 0
        %938 = vmatpush2.bf16.msra.mxu0 0
        %939 = vmatprep.subr.bf16.mxu0 0
        %940 = vmatpush2.bf16.msra.mxu0 0
        %941 = vmatprep.subr.bf16.mxu0 0
        %942 = vmatpush2.bf16.msra.mxu0 0
        %943 = vmatprep.subr.bf16.mxu0 0
        %944 = vmatpush2.bf16.msra.mxu0 0
        %945 = vmatprep.subr.bf16.mxu0 0
        %946 = vmatpush2.bf16.msra.mxu0 0
        %947 = vmatprep.subr.bf16.mxu0 0
        %948 = vmatpush2.bf16.msra.mxu0 0
        %949 = vmatprep.subr.bf16.mxu0 0
        %950 = vmatpush2.bf16.msra.mxu0 0
        %951 = vmatprep.mubr.bf16.mxu0 0
        %952 = vmatmul.mubr.bf16.gmra.mxu0 %v914
        %v953 = vpop.f32.mrf.mxu0
        %v954 = vadd.f32 0.0, %v953
        %v955 = vpop.f32.mrf.mxu0
        %v956 = vpop.f32.mrf.mxu0
        %v957 = vpop.f32.mrf.mxu0
        %958 = vdwg.mxu0
        %960 = vrot.lane.b32.xlu0 %v858, 8
        %v961 = vpop.permute.xlu0 %960
        %964 = vrot.lane.b32.xlu0 %v906, 16
        %v965 = vpop.permute.xlu0 %964
        %968 = vrot.lane.b32.xlu0 %v954, 24
        %v969 = vpop.permute.xlu0 %968
        %v971 = vsel %vm517, %v810, %v961
        %vm972 = vcmask 130048
        %v973 = vsel %vm972, %v971, %v965
        %vm974 = vcmask 195584
        %v975 = vsel %vm974, %v973, %v969
        %v976 = vpack.c.bf16 %v975, %v975
        %v977 = vld [vmem:[%s4] sm:$0xf]
        %v978 = vld [vmem:[%s4 + $0x4] sm:$0xf]
        %v979 = vld [vmem:[%s4 + $0x8] sm:$0xf]
        %v980 = vld [vmem:[%s4 + $0xc] sm:$0xf]
        %v981 = vld [vmem:[%s5] sm:$0x1]
        %v983 = vlaneseq
        %v984 = vshrl.u32 %v983, 7
        %v985 = vsub.s32 0, %v984
        %v986 = vrot.slane %v981, %v985
        %v992 = vunpack.c.l.b16 %v977
        %v993 = vunpack.c.l.b16 %v978
        %v994 = vunpack.c.l.b16 %v979
        %v995 = vunpack.c.l.b16 %v980
        %v996 = vpack.c.b16 %v993, %v992
        %v997 = vpack.c.b16 %v995, %v994
        %v1001 = vsel %vm413, %v976, 0
        %1003 = vmatprep.subr.bf16.mxu0 0
        %1004 = vmatpush1.bf16.msra.mxu0 0
        %1005 = vmatprep.subr.bf16.mxu0 0
        %1006 = vmatpush1.bf16.msra.mxu0 0
        %1007 = vmatprep.subr.bf16.mxu0 0
        %1008 = vmatpush1.bf16.msra.mxu0 0
        %1009 = vmatprep.subr.bf16.mxu0 0
        %1010 = vmatpush1.bf16.msra.mxu0 0
        %1011 = vmatprep.subr.bf16.mxu0 0
        %1012 = vmatpush1.bf16.msra.mxu0 0
        %1013 = vmatprep.subr.bf16.mxu0 0
        %1014 = vmatpush1.bf16.msra.mxu0 0
        %1015 = vmatprep.subr.bf16.mxu0 0
        %1016 = vmatpush1.bf16.msra.mxu0 %v997
        %1017 = vmatprep.subr.bf16.mxu0 0
        %1018 = vmatpush1.bf16.msra.mxu0 %v996
        %1019 = vmatprep.subr.bf16.mxu0 0
        %1020 = vmatpush2.bf16.msra.mxu0 0
        %1021 = vmatprep.subr.bf16.mxu0 0
        %1022 = vmatpush2.bf16.msra.mxu0 0
        %1023 = vmatprep.subr.bf16.mxu0 0
        %1024 = vmatpush2.bf16.msra.mxu0 0
        %1025 = vmatprep.subr.bf16.mxu0 0
        %1026 = vmatpush2.bf16.msra.mxu0 0
        %1027 = vmatprep.subr.bf16.mxu0 0
        %1028 = vmatpush2.bf16.msra.mxu0 0
        %1029 = vmatprep.subr.bf16.mxu0 0
        %1030 = vmatpush2.bf16.msra.mxu0 0
        %1031 = vmatprep.subr.bf16.mxu0 0
        %1032 = vmatpush2.bf16.msra.mxu0 0
        %1033 = vmatprep.subr.bf16.mxu0 0
        %1034 = vmatpush2.bf16.msra.mxu0 0
        %1035 = vmatprep.mubr.bf16.mxu0 0
        %1036 = vmatmul.mubr.bf16.gmra.mxu0 %v1001
        %v1037 = vpop.f32.mrf.mxu0
        %v1038 = vadd.f32 %v986, %v1037
        %v1039 = vpop.f32.mrf.mxu0
        %v1040 = vpop.f32.mrf.mxu0
        %v1041 = vpop.f32.mrf.mxu0
        %1042 = vdwg.mxu0
        %v1043 = vadd.f32 %v410, %v1038
        %v1044 = vld [vmem:[%s6] sm:$0x1]
        %v1045 = vld [vmem:[%s7] sm:$0x1]
        %v1046 = vsel %vm413, %v1043, 0.0
        %1047 = vadd.xlane.f32.xlu0 %v1046
        %v1048 = vpop.xlane.xlu0 %1047
        %v1049 = vmul.f32 %v1048, %v417
        %v1050 = vsub.f32 %v1043, %v1049
        %v1051 = vmul.f32 %v1050, %v1050
        %v1052 = vsel %vm413, %v1051, 0.0
        %1053 = vadd.xlane.f32.xlu0 %v1052
        %v1054 = vpop.xlane.xlu0 %1053
        %v1055 = vmul.f32 %v1054, %v417
        %v1056 = vadd.f32 %v1055, 1e-05
        %v1057 = vrsqrt.pop %v1056
        %v1058 = vmul.f32 %v1050, %v1057
        %v1060 = vlaneseq
        %v1061 = vshrl.u32 %v1060, 7
        %v1062 = vsub.s32 0, %v1061
        %v1063 = vrot.slane %v1044, %v1062
        %v1065 = vmul.f32 %v1058, %v1063
        %v1067 = vlaneseq
        %v1068 = vshrl.u32 %v1067, 7
        %v1069 = vsub.s32 0, %v1068
        %v1070 = vrot.slane %v1045, %v1069
        %v1072 = vadd.f32 %v1065, %v1070
        %v1073 = vpack.c.bf16 %v1072, %v1072
        %v1074 = vld [vmem:[%s8] sm:$0xf]
        %v1075 = vld [vmem:[%s8 + $0x4] sm:$0xf]
        %v1076 = vld [vmem:[%s8 + $0x8] sm:$0xf]
        %v1077 = vld [vmem:[%s8 + $0xc] sm:$0xf]
        %v1078 = vld [vmem:[%s9] sm:$0x1]
        %v1080 = vlaneseq
        %v1081 = vshrl.u32 %v1080, 7
        %v1082 = vsub.s32 0, %v1081
        %v1083 = vrot.slane %v1078, %v1082
        %v1089 = vunpack.c.l.b16 %v1074
        %v1090 = vunpack.c.l.b16 %v1075
        %v1091 = vunpack.c.l.b16 %v1076
        %v1092 = vunpack.c.l.b16 %v1077
        %v1093 = vpack.c.b16 %v1090, %v1089
        %v1094 = vpack.c.b16 %v1092, %v1091
        %v1098 = vsel %vm413, %v1073, 0
        %1100 = vmatprep.subr.bf16.mxu0 0
        %1101 = vmatpush1.bf16.msra.mxu0 0
        %1102 = vmatprep.subr.bf16.mxu0 0
        %1103 = vmatpush1.bf16.msra.mxu0 0
        %1104 = vmatprep.subr.bf16.mxu0 0
        %1105 = vmatpush1.bf16.msra.mxu0 0
        %1106 = vmatprep.subr.bf16.mxu0 0
        %1107 = vmatpush1.bf16.msra.mxu0 0
        %1108 = vmatprep.subr.bf16.mxu0 0
        %1109 = vmatpush1.bf16.msra.mxu0 0
        %1110 = vmatprep.subr.bf16.mxu0 0
        %1111 = vmatpush1.bf16.msra.mxu0 0
        %1112 = vmatprep.subr.bf16.mxu0 0
        %1113 = vmatpush1.bf16.msra.mxu0 %v1094
        %1114 = vmatprep.subr.bf16.mxu0 0
        %1115 = vmatpush1.bf16.msra.mxu0 %v1093
        %1116 = vmatprep.subr.bf16.mxu0 0
        %1117 = vmatpush2.bf16.msra.mxu0 0
        %1118 = vmatprep.subr.bf16.mxu0 0
        %1119 = vmatpush2.bf16.msra.mxu0 0
        %1120 = vmatprep.subr.bf16.mxu0 0
        %1121 = vmatpush2.bf16.msra.mxu0 0
        %1122 = vmatprep.subr.bf16.mxu0 0
        %1123 = vmatpush2.bf16.msra.mxu0 0
        %1124 = vmatprep.subr.bf16.mxu0 0
        %1125 = vmatpush2.bf16.msra.mxu0 0
        %1126 = vmatprep.subr.bf16.mxu0 0
        %1127 = vmatpush2.bf16.msra.mxu0 0
        %1128 = vmatprep.subr.bf16.mxu0 0
        %1129 = vmatpush2.bf16.msra.mxu0 0
        %1130 = vmatprep.subr.bf16.mxu0 0
        %1131 = vmatpush2.bf16.msra.mxu0 0
        %1132 = vmatprep.mubr.bf16.mxu0 0
        %1133 = vmatmul.mubr.bf16.gmra.mxu0 %v1098
        %v1134 = vpop.f32.mrf.mxu0
        %v1135 = vadd.f32 %v1083, %v1134
        %v1136 = vpop.f32.mrf.mxu0
        %v1137 = vpop.f32.mrf.mxu0
        %v1138 = vpop.f32.mrf.mxu0
        %1139 = vdwg.mxu0
        %v1140 = vmax.f32 %v1135, 0.0
        %v1141 = vpack.c.bf16 %v1140, %v1140
        %v1142 = vld [vmem:[%s10] sm:$0xf]
        %v1143 = vld [vmem:[%s10 + $0x4] sm:$0xf]
        %v1144 = vld [vmem:[%s10 + $0x8] sm:$0xf]
        %v1145 = vld [vmem:[%s10 + $0xc] sm:$0xf]
        %v1146 = vld [vmem:[%s10 + $0x10] sm:$0xf]
        %v1147 = vld [vmem:[%s10 + $0x14] sm:$0xf]
        %v1148 = vld [vmem:[%s10 + $0x18] sm:$0xf]
        %v1149 = vld [vmem:[%s10 + $0x1c] sm:$0xf]
        %v1150 = vld [vmem:[%s10 + $0x20] sm:$0xf]
        %v1151 = vld [vmem:[%s10 + $0x24] sm:$0xf]
        %v1152 = vld [vmem:[%s10 + $0x28] sm:$0xf]
        %v1153 = vld [vmem:[%s10 + $0x2c] sm:$0xf]
        %v1154 = vld [vmem:[%s10 + $0x30] sm:$0xf]
        %v1155 = vld [vmem:[%s10 + $0x34] sm:$0xf]
        %v1156 = vld [vmem:[%s10 + $0x38] sm:$0xf]
        %v1157 = vld [vmem:[%s10 + $0x3c] sm:$0xf]
        %v1158 = vld [vmem:[%s11] sm:$0x1]
        %v1160 = vlaneseq
        %v1161 = vshrl.u32 %v1160, 7
        %v1162 = vsub.s32 0, %v1161
        %v1163 = vrot.slane %v1158, %v1162
        %v1181 = vunpack.c.l.b16 %v1142
        %v1182 = vunpack.c.l.b16 %v1143
        %v1183 = vunpack.c.l.b16 %v1144
        %v1184 = vunpack.c.l.b16 %v1145
        %v1185 = vunpack.c.l.b16 %v1146
        %v1186 = vunpack.c.l.b16 %v1147
        %v1187 = vunpack.c.l.b16 %v1148
        %v1188 = vunpack.c.l.b16 %v1149
        %v1189 = vunpack.c.l.b16 %v1150
        %v1190 = vunpack.c.l.b16 %v1151
        %v1191 = vunpack.c.l.b16 %v1152
        %v1192 = vunpack.c.l.b16 %v1153
        %v1193 = vunpack.c.l.b16 %v1154
        %v1194 = vunpack.c.l.b16 %v1155
        %v1195 = vunpack.c.l.b16 %v1156
        %v1196 = vunpack.c.l.b16 %v1157
        %v1197 = vpack.c.b16 %v1182, %v1181
        %v1198 = vpack.c.b16 %v1184, %v1183
        %v1199 = vpack.c.b16 %v1186, %v1185
        %v1200 = vpack.c.b16 %v1188, %v1187
        %v1201 = vpack.c.b16 %v1190, %v1189
        %v1202 = vpack.c.b16 %v1192, %v1191
        %v1203 = vpack.c.b16 %v1194, %v1193
        %v1204 = vpack.c.b16 %v1196, %v1195
        %1213 = vmatprep.subr.bf16.mxu0 0
        %1214 = vmatpush1.bf16.msra.mxu0 %v1204
        %1215 = vmatprep.subr.bf16.mxu0 0
        %1216 = vmatpush1.bf16.msra.mxu0 %v1203
        %1217 = vmatprep.subr.bf16.mxu0 0
        %1218 = vmatpush1.bf16.msra.mxu0 %v1202
        %1219 = vmatprep.subr.bf16.mxu0 0
        %1220 = vmatpush1.bf16.msra.mxu0 %v1201
        %1221 = vmatprep.subr.bf16.mxu0 0
        %1222 = vmatpush1.bf16.msra.mxu0 %v1200
        %1223 = vmatprep.subr.bf16.mxu0 0
        %1224 = vmatpush1.bf16.msra.mxu0 %v1199
        %1225 = vmatprep.subr.bf16.mxu0 0
        %1226 = vmatpush1.bf16.msra.mxu0 %v1198
        %1227 = vmatprep.subr.bf16.mxu0 0
        %1228 = vmatpush1.bf16.msra.mxu0 %v1197
        %1229 = vmatprep.subr.bf16.mxu0 0
        %1230 = vmatpush2.bf16.msra.mxu0 0
        %1231 = vmatprep.subr.bf16.mxu0 0
        %1232 = vmatpush2.bf16.msra.mxu0 0
        %1233 = vmatprep.subr.bf16.mxu0 0
        %1234 = vmatpush2.bf16.msra.mxu0 0
        %1235 = vmatprep.subr.bf16.mxu0 0
        %1236 = vmatpush2.bf16.msra.mxu0 0
        %1237 = vmatprep.subr.bf16.mxu0 0
        %1238 = vmatpush2.bf16.msra.mxu0 0
        %1239 = vmatprep.subr.bf16.mxu0 0
        %1240 = vmatpush2.bf16.msra.mxu0 0
        %1241 = vmatprep.subr.bf16.mxu0 0
        %1242 = vmatpush2.bf16.msra.mxu0 0
        %1243 = vmatprep.subr.bf16.mxu0 0
        %1244 = vmatpush2.bf16.msra.mxu0 0
        %1245 = vmatprep.mubr.bf16.mxu0 0
        %1246 = vmatmul.mubr.bf16.gmra.mxu0 %v1141
        %v1247 = vpop.f32.mrf.mxu0
        %v1248 = vadd.f32 %v1163, %v1247
        %v1249 = vpop.f32.mrf.mxu0
        %v1250 = vpop.f32.mrf.mxu0
        %v1251 = vpop.f32.mrf.mxu0
        %1252 = vdwg.mxu0
        %v1253 = vadd.f32 %v1043, %v1248
        %1254 = vst.msk [vmem:[%s404] sm:$0xff] %vm413, %v1253
        %s1255 = sand.u32 %s291, 1
        %s1256 = scalar_lea.sflag [#allocation3], %s1255
        %s1257 = sand.u32 %s291, 1
        %s1258 = smul.addr %s1257, 8
        %s1259 = scalar_lea.vmem [#allocation2], %s1258
        // Predicated region
        $region69: #{tpu_custom_call.1} parent=67 // pred_check
          %p1260 = pneg %p301
        $region70: #{tpu_custom_call.1} parent=67 // pred_check_branch
          %1262 = sbr.rel (%p1260) target = $region72
        $region71: #{tpu_custom_call.1} parent=67 // pred_region
          %s1264 = ssub.s32 128, 128
          %1265 = vsyncadd %s1256, %s1264
          %s1266 = smul.addr %s26, 128
          %s1267 = scalar_lea.hbm %s12, %s1266
          %s1269 = sshll.u32 %s1259, 4
          %s1270 = int_to_ptr.vmem [resolvable:$true] %s1269
          %1272 = dma.vmem_to_hbm [thread:$0]  %s1270, 128, %s1267, %s1256
        $region72: #{tpu_custom_call.1} parent=67 // pred_fallthru
          _
      $region68: #{tpu_custom_call.1} parent=5 // pred_fallthru
        _
      %p1273 = scmp.le.s32.totalorder 2, %s21
      // Predicated region
      $region73: #{tpu_custom_call.1} parent=5 // pred_check
        %p1274 = pneg %p1273
      $region74: #{tpu_custom_call.1} parent=5 // pred_check_branch
        %1276 = sbr.rel (%p1274) target = $region76
      $region75: #{tpu_custom_call.1} parent=5 // pred_region
        %s1277 = ssub.s32 %s21, 2
        // Predicated region
        $region77: #{tpu_custom_call.1} parent=75 // pred_check
          %p1278 = pneg %p307
        $region78: #{tpu_custom_call.1} parent=75 // pred_check_branch
          %1280 = sbr.rel (%p1278) target = $region80
        $region79: #{tpu_custom_call.1} parent=75 // pred_region
          %s1281 = sand.u32 %s292, 1
          %s1282 = scalar_lea.sflag [#allocation3], %s1281
          %s1283 = sand.u32 %s292, 1
          %s1284 = smul.addr %s1283, 8
          %s1285 = scalar_lea.vmem [#allocation2], %s1284
          %1286 = dma.done %s1282, 128
        $region80: #{tpu_custom_call.1} parent=75 // pred_fallthru
          _
      $region76: #{tpu_custom_call.1} parent=5 // pred_fallthru
        _
    $region6: #{tpu_custom_call.1} parent=1 // loop_footer
      %s25 = sadd.s32 1, %s21
    $region7: #{tpu_custom_call.1} parent=1 // loop_footer_branch
      %20 = sbr.rel target = $region3
    $region8: #{tpu_custom_call.1} parent=1 // loop_exit
      _
    %1287 = vsyncpa [#allocation3], 1
    %s1288 = scalar_lea.sflag [#allocation3], 1
    %1289 = vsyncpa %s1288, 1

</llo_original>
